<compile_context>
chip_gen: v6e
topology: v6e:2x2x1
jax: 0.10.0
libtpu: 0.0.40
codegen_flags: <defaults>
</compile_context>

<pallas_src>
import jax
import jax.numpy as jnp
from jax import lax
from jax.experimental import pallas as pl
from jax.experimental.pallas import tpu as pltpu

IN_FEATURES = 128 * 100   # 12800
OUT_FEATURES = 100


def _mmdnet_kernel(x_ref, w_ref, b_ref, o_ref):
    """One K-step: o += x_tile @ w_tile^T; bias + ReLU on the last step.

    x_ref: (B, tk) bf16     w_ref: (N, tk) bf16 (native nn.Linear layout)
    b_ref: (1, N)  f32      o_ref: (B, N)  f32 (resident across K axis)
    """
    k = pl.program_id(0)

    @pl.when(k == 0)
    def _():
        o_ref[...] = jnp.zeros_like(o_ref)

    # Contract K on both operands: (B, tk) x (N, tk) -> (B, N), f32 accumulate.
    o_ref[...] += lax.dot_general(
        x_ref[...], w_ref[...],
        dimension_numbers=(((1,), (1,)), ((), ())),
        preferred_element_type=jnp.float32,
    )

    @pl.when(k == pl.num_programs(0) - 1)
    def _():
        o_ref[...] = jnp.maximum(o_ref[...] + b_ref[...], 0.0)


def mmdnet_forward(x, w, b, *, tk=3200):
    """x: (B, ...) flattened to (B, K); w: (N, K) native layout; b: (N,).

    Returns (B, N) float32: ReLU(x @ w.T + b).
    """
    B = x.shape[0]
    x2 = x.reshape(B, -1).astype(jnp.bfloat16)      # x.view(B, -1), bf16 stream
    K = x2.shape[1]
    N, Kw = w.shape
    assert K == Kw, "weight K must match flattened input features"
    assert K % tk == 0, "K tile must divide K (pick a divisor of 12800, mult. of 128)"

    w_bf = w.astype(jnp.bfloat16)                    # bf16 weight stream
    b2 = b.astype(jnp.float32).reshape(1, N)

    n_steps = K // tk
    cost = pl.CostEstimate(
        flops=2 * B * K * N,
        transcendentals=0,
        bytes_accessed=B * K * 2 + N * K * 2 + N * 4 + B * N * 4,
    )

    return pl.pallas_call(
        _mmdnet_kernel,
        out_shape=jax.ShapeDtypeStruct((B, N), jnp.float32),
        grid_spec=pltpu.PrefetchScalarGridSpec(
            num_scalar_prefetch=0,
            grid=(n_steps,),                          # K reduction only
            in_specs=[
                pl.BlockSpec((B, tk), lambda k: (0, k)),   # x tile
                pl.BlockSpec((N, tk), lambda k: (0, k)),   # w tile (native N,K)
                pl.BlockSpec((1, N), lambda k: (0, 0)),    # bias (resident)
            ],
            out_specs=pl.BlockSpec((B, N), lambda k: (0, 0)),  # resident accum
        ),
        compiler_params=pltpu.CompilerParams(
            # K is a reduction axis. With B=2 there is nothing worth sharding
            # across v7x's two TensorCores; add a leading "parallel" B/N axis
            # if the production batch grows.
            dimension_semantics=("arbitrary",),
        ),
        cost_estimate=cost,
    )(x2, w_bf, b2)


def _init_params(key):
    """Deterministic init mimicking nn.Linear default (uniform +/- 1/sqrt(K))."""
    kw, kb = jax.random.split(key)
    bound = 1.0 / jnp.sqrt(jnp.float32(IN_FEATURES))
    w = jax.random.uniform(
        kw, (OUT_FEATURES, IN_FEATURES), jnp.float32, -bound, bound
    )
    b = jax.random.uniform(kb, (OUT_FEATURES,), jnp.float32, -bound, bound)
    return w, b


if __name__ == "__main__":
    key = jax.random.PRNGKey(0)
    k_x, k_p = jax.random.split(key)

    # Input consistent with the module: flattens to 128*100 features per row.
    B = 2
    x = jax.random.normal(k_x, (B, 128, 100), jnp.float32)

    w, b = _init_params(k_p)          # w: (100, 12800) native nn.Linear layout

    y = mmdnet_forward(x, w, b)
    y = jax.block_until_ready(y)

    # Reference with identical input rounding (bf16 inputs, f32 accumulation).
    xb = x.reshape(B, -1).astype(jnp.bfloat16).astype(jnp.float32)
    wb = w.astype(jnp.bfloat16).astype(jnp.float32)
    y_ref = jnp.maximum(xb @ wb.T + b, 0.0)

    assert y.shape == (B, OUT_FEATURES)
    assert jnp.allclose(y, y_ref, atol=1e-2, rtol=1e-2)

    print("KERNEL_OK")
</pallas_src>

<mosaic_0001>
module attributes {stable_mosaic.version = 11 : i64} {
  func.func @_mmdnet_kernel(%arg0: i32, %arg1: memref<2x3200xbf16, #tpu.memory_space<vmem>>, %arg2: memref<100x3200xbf16, #tpu.memory_space<vmem>>, %arg3: memref<1x100xf32, #tpu.memory_space<vmem>>, %arg4: memref<2x100xf32, #tpu.memory_space<vmem>>) attributes {dimension_semantics = [#tpu.dimension_semantics<arbitrary>], iteration_bounds = array<i64: 4>, scalar_prefetch = 0 : i64, scratch_operands = 0 : i64, tpu.core_type = #tpu.core_type<tc>, window_params = [{transform_indices = @transform_0, window_bounds = array<i64: 2, 3200>}, {transform_indices = @transform_1, window_bounds = array<i64: 100, 3200>}, {pipeline_mode = #tpu.pipeline_mode<synchronous>, transform_indices = @transform_2, window_bounds = array<i64: 1, 100>}, {pipeline_mode = #tpu.pipeline_mode<synchronous>, transform_indices = @transform_3, window_bounds = array<i64: 2, 100>}]} {
    %c0_i32 = arith.constant 0 : i32
    %0 = arith.cmpi eq, %arg0, %c0_i32 : i32
    %1 = arith.extui %0 : i1 to i32
    %c0_i32_0 = arith.constant 0 : i32
    %2 = arith.cmpi ne, %1, %c0_i32_0 : i32
    scf.if %2 {
      %cst_9 = arith.constant 0.000000e+00 : f32
      %12 = vector.broadcast %cst_9 : f32 to vector<2x100xf32>
      %c0_10 = arith.constant 0 : index
      %c0_11 = arith.constant 0 : index
      %13 = vector.load %arg4[%c0_10, %c0_11] : memref<2x100xf32, #tpu.memory_space<vmem>>, vector<2x100xf32>
      tpu.vector_store %arg4[%c0_10, %c0_11], %12 {strides = array<i32>} : memref<2x100xf32, #tpu.memory_space<vmem>>, vector<2x100xf32>,
    } else {
    }
    %c0 = arith.constant 0 : index
    %c0_1 = arith.constant 0 : index
    %3 = vector.load %arg4[%c0, %c0_1] : memref<2x100xf32, #tpu.memory_space<vmem>>, vector<2x100xf32>
    %c0_2 = arith.constant 0 : index
    %c0_3 = arith.constant 0 : index
    %4 = vector.load %arg1[%c0_2, %c0_3] : memref<2x3200xbf16, #tpu.memory_space<vmem>>, vector<2x3200xbf16>
    %c0_4 = arith.constant 0 : index
    %c0_5 = arith.constant 0 : index
    %5 = vector.load %arg2[%c0_4, %c0_5] : memref<100x3200xbf16, #tpu.memory_space<vmem>>, vector<100x3200xbf16>
    %cst = arith.constant dense<0.000000e+00> : vector<2x100xf32>
    %6 = tpu.matmul %4, %5, %cst {dimension_numbers = #tpu.dot_dimension_numbers<[1], [1], [0], [0], [0, 0, 1, 0], [], []>} : vector<2x3200xbf16>, vector<100x3200xbf16>, vector<2x100xf32> -> vector<2x100xf32>
    %7 = arith.addf %3, %6 : vector<2x100xf32>
    %c0_6 = arith.constant 0 : index
    %c0_7 = arith.constant 0 : index
    %8 = vector.load %arg4[%c0_6, %c0_7] : memref<2x100xf32, #tpu.memory_space<vmem>>, vector<2x100xf32>
    tpu.vector_store %arg4[%c0_6, %c0_7], %7 {strides = array<i32>} : memref<2x100xf32, #tpu.memory_space<vmem>>, vector<2x100xf32>,
    %c3_i32 = arith.constant 3 : i32
    %9 = arith.cmpi eq, %arg0, %c3_i32 : i32
    %10 = arith.extui %9 : i1 to i32
    %c0_i32_8 = arith.constant 0 : i32
    %11 = arith.cmpi ne, %10, %c0_i32_8 : i32
    scf.if %11 {
      %c0_9 = arith.constant 0 : index
      %c0_10 = arith.constant 0 : index
      %12 = vector.load %arg4[%c0_9, %c0_10] : memref<2x100xf32, #tpu.memory_space<vmem>>, vector<2x100xf32>
      %c0_11 = arith.constant 0 : index
      %c0_12 = arith.constant 0 : index
      %13 = vector.load %arg3[%c0_11, %c0_12] : memref<1x100xf32, #tpu.memory_space<vmem>>, vector<1x100xf32>
      %14 = vector.broadcast %13 : vector<1x100xf32> to vector<2x100xf32>
      %15 = arith.addf %12, %14 : vector<2x100xf32>
      %cst_13 = arith.constant 0.000000e+00 : f32
      %16 = vector.broadcast %cst_13 : f32 to vector<2x100xf32>
      %17 = arith.maximumf %15, %16 : vector<2x100xf32>
      %c0_14 = arith.constant 0 : index
      %c0_15 = arith.constant 0 : index
      %18 = vector.load %arg4[%c0_14, %c0_15] : memref<2x100xf32, #tpu.memory_space<vmem>>, vector<2x100xf32>
      tpu.vector_store %arg4[%c0_14, %c0_15], %17 {strides = array<i32>} : memref<2x100xf32, #tpu.memory_space<vmem>>, vector<2x100xf32>,
    } else {
    }
    return
  }
  func.func @transform_0(%arg0: i32) -> (i32, i32) {
    %c0_i32 = arith.constant 0 : i32
    %c0_i32_0 = arith.constant 0 : i32
    return %c0_i32, %arg0 : i32, i32
  }
  func.func @transform_1(%arg0: i32) -> (i32, i32) {
    %c0_i32 = arith.constant 0 : i32
    %c0_i32_0 = arith.constant 0 : i32
    return %c0_i32, %arg0 : i32, i32
  }
  func.func @transform_2(%arg0: i32) -> (i32, i32) {
    %c0_i32 = arith.constant 0 : i32
    %c0_i32_0 = arith.constant 0 : i32
    %c0_i32_1 = arith.constant 0 : i32
    return %c0_i32, %c0_i32_0 : i32, i32
  }
  func.func @transform_3(%arg0: i32) -> (i32, i32) {
    %c0_i32 = arith.constant 0 : i32
    %c0_i32_0 = arith.constant 0 : i32
    %c0_i32_1 = arith.constant 0 : i32
    return %c0_i32, %c0_i32_0 : i32, i32
  }
}

</mosaic_0001>

<llo_original>
// kernel: tpu_custom_call.1
$region0: #{tpu_custom_call.1}
  #allocation0 [shape = 'u32[]', space=smem, size = 0x4, offset = 0x4, fixed_abs, tag = 'smem constant byte address 0x4 - core index']
  #allocation1 [shape = 'u32[144,128]{1,0:T(1,128)}', space=vmem, size = 0x12000, scoped, tag = 'internal scratch']
  %s0 = inlined_call_operand.hbm [shape: bf16[2,12800], index: 0, kind: input, shape index: {}]
  %s1 = inlined_call_operand.hbm [shape: bf16[100,12800], index: 1, kind: input, shape index: {}]
  %s2 = inlined_call_operand.hbm [shape: f32[1,100], index: 2, kind: input, shape index: {}]
  %s3 = inlined_call_operand.hbm [shape: f32[2,100], index: 3, kind: output, shape index: {}]
  %s4 = sld [smem:[#allocation0]]
  $region65: #{tpu_custom_call.1} parent=0
    _
  %s6 = ssub.s32 1, %s4
  %s7 = scalar_select 0, %s6, %s4
  $region1: #{tpu_custom_call.1} parent=0
    #allocation2 [shape = 'u8[25600]{0}', space=vmem, size = 0x6400, scoped, tag = 'input window, operand 0']
    #allocation3 [shape = 's32[2]{0}', space=sflag, size = 0x8, scoped, tag = 'scoped memory for tpu_custom_call.1']
    #allocation4 [shape = 's32[2]{0}', space=sflag, size = 0x8, scoped, tag = 'scoped memory for tpu_custom_call.1']
    #allocation5 [shape = 'u8[1331200]{0}', space=vmem, size = 0x145000, scoped, tag = 'input window, operand 1']
    #allocation6 [shape = 's32[2]{0}', space=sflag, size = 0x8, scoped, tag = 'scoped memory for tpu_custom_call.1']
    #allocation7 [shape = 'u8[512]{0}', space=vmem, size = 0x400, scoped, tag = 'input window, operand 2, single buffered']
    #allocation8 [shape = 'u8[1024]{0}', space=vmem, size = 0x400, scoped, tag = 'output window, operand 0, single buffered']
    %8 = vsyncpa [#allocation3], 0
    %s9 = scalar_lea.sflag [#allocation3], 1
    %10 = vsyncpa %s9, 0
    %11 = vsyncpa [#allocation6], 0
    %s12 = scalar_lea.sflag [#allocation6], 1
    %13 = vsyncpa %s12, 0
    %14 = vsyncpa [#allocation4], 0
    loop: start=0, step=1, limit=6
    $region2: #{tpu_custom_call.1} parent=1 // loop_pre_header
      _
    $region3: #{tpu_custom_call.1} parent=1 // loop_header
      %s16 = sphi 0, %s20
      %p17 = scmp.ge.s32.totalorder %s16, 6
      %s26 = sphi 0, %s28
      %s29 = sphi 0, %s26
      %s30 = sphi 0, %s29
      %s46 = sphi 0, %s30
      %s52 = sphi 0, %s54
      %s55 = sphi 0, %s52
      %s56 = sphi 0, %s55
      %s72 = sphi 0, %s56
      %s76 = sphi 0, %s76
      %s78 = sphi 0, %s76
      %s79 = sphi 0, %s78
      %s93 = sphi 0, %s79
      %s97 = sphi 0, %s97
      %s99 = sphi 0, %s97
      %s100 = sphi 0, %s99
      %s114 = sphi 0, %s100
    $region4: #{tpu_custom_call.1} parent=1 // loop_header_branch
      %19 = sbr.rel (%p17) target = $region8
    $region5: #{tpu_custom_call.1} parent=1 // loop_body
      %s21 = ssub.s32 %s16, 1
      %s22 = ssub.s32 %s16, 2
      %s23 = sadd.s32 %s16, 1
      %s24 = ssub.s32 %s16, %s23
      %p25 = scmp.eq.s32.totalorder %s24, 0
      %s27 = sadd.s32 %s26, 1
      %s28 = scalar_select %p25, %s26, %s27
      %p31 = pneg %p25
      %p32 = scmp.eq.s32.totalorder %s16, 3
      %p33 = por %p31, %p32
      %p34 = scmp.ne.s32.totalorder %s26, %s29
      %p35 = scmp.eq.s32.totalorder %s16, 0
      %p36 = por %p34, %p35
      %p37 = scmp.ne.s32.totalorder %s26, %s29
      %p38 = scmp.eq.s32.totalorder %s21, 3
      %p39 = por %p37, %p38
      %p40 = scmp.ne.s32.totalorder %s29, %s30
      %p41 = scmp.eq.s32.totalorder %s21, 0
      %p42 = por %p40, %p41
      %p43 = scmp.ne.s32.totalorder %s29, %s30
      %p44 = scmp.eq.s32.totalorder %s22, 3
      %p45 = por %p43, %p44
      %p47 = scmp.ne.s32.totalorder %s30, %s46
      %p48 = scmp.eq.s32.totalorder %s22, 0
      %p49 = por %p47, %p48
      %s50 = ssub.s32 %s16, %s23
      %p51 = scmp.eq.s32.totalorder %s50, 0
      %s53 = sadd.s32 %s52, 1
      %s54 = scalar_select %p51, %s52, %s53
      %p57 = pneg %p51
      %p58 = scmp.eq.s32.totalorder %s16, 3
      %p59 = por %p57, %p58
      %p60 = scmp.ne.s32.totalorder %s52, %s55
      %p61 = scmp.eq.s32.totalorder %s16, 0
      %p62 = por %p60, %p61
      %p63 = scmp.ne.s32.totalorder %s52, %s55
      %p64 = scmp.eq.s32.totalorder %s21, 3
      %p65 = por %p63, %p64
      %p66 = scmp.ne.s32.totalorder %s55, %s56
      %p67 = scmp.eq.s32.totalorder %s21, 0
      %p68 = por %p66, %p67
      %p69 = scmp.ne.s32.totalorder %s55, %s56
      %p70 = scmp.eq.s32.totalorder %s22, 3
      %p71 = por %p69, %p70
      %p73 = scmp.ne.s32.totalorder %s56, %s72
      %p74 = scmp.eq.s32.totalorder %s22, 0
      %p75 = por %p73, %p74
      %s77 = sadd.s32 %s76, 1
      %p80 = scmp.eq.s32.totalorder %s16, 3
      %p81 = scmp.ne.s32.totalorder %s76, %s78
      %p82 = scmp.eq.s32.totalorder %s16, 0
      %p83 = por %p81, %p82
      %p84 = scmp.ne.s32.totalorder %s76, %s78
      %p85 = scmp.eq.s32.totalorder %s21, 3
      %p86 = por %p84, %p85
      %p87 = scmp.ne.s32.totalorder %s78, %s79
      %p88 = scmp.eq.s32.totalorder %s21, 0
      %p89 = por %p87, %p88
      %p90 = scmp.ne.s32.totalorder %s78, %s79
      %p91 = scmp.eq.s32.totalorder %s22, 3
      %p92 = por %p90, %p91
      %p94 = scmp.ne.s32.totalorder %s79, %s93
      %p95 = scmp.eq.s32.totalorder %s22, 0
      %p96 = por %p94, %p95
      %s98 = sadd.s32 %s97, 1
      %p101 = scmp.eq.s32.totalorder %s16, 3
      %p102 = scmp.ne.s32.totalorder %s97, %s99
      %p103 = scmp.eq.s32.totalorder %s16, 0
      %p104 = por %p102, %p103
      %p105 = scmp.ne.s32.totalorder %s97, %s99
      %p106 = scmp.eq.s32.totalorder %s21, 3
      %p107 = por %p105, %p106
      %p108 = scmp.ne.s32.totalorder %s99, %s100
      %p109 = scmp.eq.s32.totalorder %s21, 0
      %p110 = por %p108, %p109
      %p111 = scmp.ne.s32.totalorder %s99, %s100
      %p112 = scmp.eq.s32.totalorder %s22, 3
      %p113 = por %p111, %p112
      %p115 = scmp.ne.s32.totalorder %s100, %s114
      %p116 = scmp.eq.s32.totalorder %s22, 0
      %p117 = por %p115, %p116
      %p118 = scmp.le.s32.totalorder 1, %s16
      %p119 = scmp.lt.s32.totalorder %s16, 5
      %p120 = pnand %p118, %p119
      %p121 = pneg %p120
      // Predicated region
      $region9: #{tpu_custom_call.1} parent=5 // pred_check
        _
      $region10: #{tpu_custom_call.1} parent=5 // pred_check_branch
        %123 = sbr.rel (%p120) target = $region12
      $region11: #{tpu_custom_call.1} parent=5 // pred_region
        %s124 = ssub.s32 %s16, 1
        // Predicated region
        $region13: #{tpu_custom_call.1} parent=11 // pred_check
          %p125 = pneg %p89
        $region14: #{tpu_custom_call.1} parent=11 // pred_check_branch
          %127 = sbr.rel (%p125) target = $region16
        $region15: #{tpu_custom_call.1} parent=11 // pred_region
          %s129 = ssub.s32 16, 16
          %130 = vsyncadd [#allocation6], %s129
          %s132 = sshll.u32 [#allocation7], 4
          %s133 = int_to_ptr.vmem [resolvable:$true] %s132
          %135 = dma.hbm_to_vmem [thread:$0]  %s2, 16, %s133, [#allocation6]
        $region16: #{tpu_custom_call.1} parent=11 // pred_fallthru
          _
      $region12: #{tpu_custom_call.1} parent=5 // pred_fallthru
        _
      %p136 = scmp.lt.s32.totalorder %s16, 4
      // Predicated region
      $region17: #{tpu_custom_call.1} parent=5 // pred_check
        %p137 = pneg %p136
      $region18: #{tpu_custom_call.1} parent=5 // pred_check_branch
        %139 = sbr.rel (%p137) target = $region20
      $region19: #{tpu_custom_call.1} parent=5 // pred_region
        // Predicated region
        $region21: #{tpu_custom_call.1} parent=19 // pred_check
          %p140 = pneg %p36
        $region22: #{tpu_custom_call.1} parent=19 // pred_check_branch
          %142 = sbr.rel (%p140) target = $region24
        $region23: #{tpu_custom_call.1} parent=19 // pred_region
          %s143 = sand.u32 %s26, 1
          %s144 = scalar_lea.sflag [#allocation3], %s143
          %s145 = sand.u32 %s26, 1
          %s146 = smul.addr %s145, 25
          %s147 = scalar_lea.vmem [#allocation2], %s146
          %s148 = smul.u32 25, %s16
          %s150 = ssub.s32 400, 400
          %151 = vsyncadd %s144, %s150
          %s152 = smul.addr %s148, 16
          %s153 = scalar_lea.hbm %s0, %s152
          %s155 = sshll.u32 %s147, 4
          %s156 = int_to_ptr.vmem [resolvable:$true] %s155
          %158 = dma.hbm_to_vmem [thread:$0]  %s153, 400, %s156, %s144
        $region24: #{tpu_custom_call.1} parent=19 // pred_fallthru
          _
        // Predicated region
        $region25: #{tpu_custom_call.1} parent=19 // pred_check
          %p159 = pneg %p62
        $region26: #{tpu_custom_call.1} parent=19 // pred_check_branch
          %161 = sbr.rel (%p159) target = $region28
        $region27: #{tpu_custom_call.1} parent=19 // pred_region
          %s162 = sand.u32 %s16, 1
          %s163 = scalar_lea.sflag [#allocation6], %s162
          %s164 = sand.u32 %s52, 1
          %s165 = smul.addr %s164, 1300
          %s166 = scalar_lea.vmem [#allocation5], %s165
          %s167 = smul.u32 25, %s16
          %s169 = ssub.s32 20800, 20800
          %170 = vsyncadd %s163, %s169
          %s171 = smul.addr %s167, 64
          %s172 = scalar_lea.hbm %s1, %s171
          %s173 = sshll.u32 %s166, 4
          %s174 = int_to_ptr.vmem [resolvable:$true] %s173
          %179 = dma.hbm_to_vmem [thread:$0]  %s172, 20800, %s174, %s163, 6400, 1600, 100
        $region28: #{tpu_custom_call.1} parent=19 // pred_fallthru
          _
      $region20: #{tpu_custom_call.1} parent=5 // pred_fallthru
        _
      %p180 = scmp.le.s32.totalorder 1, %s16
      %p181 = scmp.lt.s32.totalorder %s16, 5
      %p182 = pnand %p180, %p181
      %p183 = pneg %p182
      // Predicated region
      $region29: #{tpu_custom_call.1} parent=5 // pred_check
        _
      $region30: #{tpu_custom_call.1} parent=5 // pred_check_branch
        %185 = sbr.rel (%p182) target = $region32
      $region31: #{tpu_custom_call.1} parent=5 // pred_region
        %s186 = ssub.s32 %s16, 1
        %s187 = sand.u32 %s29, 1
        %s188 = scalar_lea.sflag [#allocation3], %s187
        %s189 = sand.u32 %s29, 1
        %s190 = smul.addr %s189, 25
        %s191 = scalar_lea.vmem [#allocation2], %s190
        // Predicated region
        $region33: #{tpu_custom_call.1} parent=31 // pred_check
          %p192 = pneg %p42
        $region34: #{tpu_custom_call.1} parent=31 // pred_check_branch
          %194 = sbr.rel (%p192) target = $region36
        $region35: #{tpu_custom_call.1} parent=31 // pred_region
          %195 = dma.done %s188, 400
        $region36: #{tpu_custom_call.1} parent=31 // pred_fallthru
          _
        %s196 = sand.u32 %s21, 1
        %s197 = scalar_lea.sflag [#allocation6], %s196
        %s198 = sand.u32 %s55, 1
        %s199 = smul.addr %s198, 1300
        %s200 = scalar_lea.vmem [#allocation5], %s199
        // Predicated region
        $region37: #{tpu_custom_call.1} parent=31 // pred_check
          %p201 = pneg %p68
        $region38: #{tpu_custom_call.1} parent=31 // pred_check_branch
          %203 = sbr.rel (%p201) target = $region40
        $region39: #{tpu_custom_call.1} parent=31 // pred_region
          %204 = dma.done %s197, 20800
        $region40: #{tpu_custom_call.1} parent=31 // pred_fallthru
          _
        // Predicated region
        $region41: #{tpu_custom_call.1} parent=31 // pred_check
          %p205 = pneg %p89
        $region42: #{tpu_custom_call.1} parent=31 // pred_check_branch
          %207 = sbr.rel (%p205) target = $region44
        $region43: #{tpu_custom_call.1} parent=31 // pred_region
          %208 = dma.done [#allocation6], 16
        $region44: #{tpu_custom_call.1} parent=31 // pred_fallthru
          _
        %s209 = sand.u32 %s29, 1
        %s210 = scalar_lea.sflag [#allocation3], %s209
        %s211 = sand.u32 %s29, 1
        %s212 = smul.addr %s211, 25
        %s213 = scalar_lea.vmem [#allocation2], %s212
        %p214 = pneg %p42
        %p215 = pneg %p39
        %s216 = sand.u32 %s21, 1
        %s217 = scalar_lea.sflag [#allocation6], %s216
        %s218 = sand.u32 %s55, 1
        %s219 = smul.addr %s218, 1300
        %s220 = scalar_lea.vmem [#allocation5], %s219
        %p221 = pneg %p68
        %p222 = pneg %p65
        %p223 = pneg %p89
        %p224 = pneg %p86
        %p225 = pneg %p110
        %p226 = pneg %p107
        %s227 = smul.u32 25, %s21
        %s228 = smul.u32 25, %s21
        %p230 = scmp.eq.s32.totalorder %s21, 0
        // Predicated region
        $region45: #{tpu_custom_call.1} parent=31 // pred_check
          %p231 = pneg %p230
        $region46: #{tpu_custom_call.1} parent=31 // pred_check_branch
          %233 = sbr.rel (%p231) target = $region48
        $region47: #{tpu_custom_call.1} parent=31 // pred_region
          %vm234 = vcmask 812032
          %235 = vst.msk [vmem:[#allocation8] sm:$0x3] %vm234, 0.0
        $region48: #{tpu_custom_call.1} parent=31 // pred_fallthru
          _
        %v236 = vld [vmem:[#allocation8] sm:$0x3]
        %v237 = vld [vmem:[%s191] sm:$0xff]
        %v238 = vld [vmem:[%s191 + $0x8] sm:$0xff]
        %v239 = vld [vmem:[%s191 + $0x10] sm:$0xff]
        %v240 = vld [vmem:[%s191 + $0x18] sm:$0x1]
        %v241 = vld [vmem:[%s200] sm:$0xff]
        %v242 = vld [vmem:[%s200 + $0x8] sm:$0xff]
        %v243 = vld [vmem:[%s200 + $0x10] sm:$0xff]
        %v244 = vld [vmem:[%s200 + $0x18] sm:$0xff]
        %v245 = vld [vmem:[%s200 + $0x20] sm:$0xff]
        %v246 = vld [vmem:[%s200 + $0x28] sm:$0xff]
        %v247 = vld [vmem:[%s200 + $0x30] sm:$0xff]
        %v248 = vld [vmem:[%s200 + $0x38] sm:$0xff]
        %v249 = vld [vmem:[%s200 + $0x40] sm:$0xff]
        %v250 = vld [vmem:[%s200 + $0x48] sm:$0xff]
        %v251 = vld [vmem:[%s200 + $0x50] sm:$0xff]
        %v252 = vld [vmem:[%s200 + $0x58] sm:$0xff]
        %v253 = vld [vmem:[%s200 + $0x60] sm:$0xf]
        %v254 = vld [vmem:[%s200 + $0x64] sm:$0xff]
        %v255 = vld [vmem:[%s200 + $0x6c] sm:$0xff]
        %v256 = vld [vmem:[%s200 + $0x74] sm:$0xff]
        %v257 = vld [vmem:[%s200 + $0x7c] sm:$0xff]
        %v258 = vld [vmem:[%s200 + $0x84] sm:$0xff]
        %v259 = vld [vmem:[%s200 + $0x8c] sm:$0xff]
        %v260 = vld [vmem:[%s200 + $0x94] sm:$0xff]
        %v261 = vld [vmem:[%s200 + $0x9c] sm:$0xff]
        %v262 = vld [vmem:[%s200 + $0xa4] sm:$0xff]
        %v263 = vld [vmem:[%s200 + $0xac] sm:$0xff]
        %v264 = vld [vmem:[%s200 + $0xb4] sm:$0xff]
        %v265 = vld [vmem:[%s200 + $0xbc] sm:$0xff]
        %v266 = vld [vmem:[%s200 + $0xc4] sm:$0xf]
        %v267 = vld [vmem:[%s200 + $0xc8] sm:$0xff]
        %v268 = vld [vmem:[%s200 + $0xd0] sm:$0xff]
        %v269 = vld [vmem:[%s200 + $0xd8] sm:$0xff]
        %v270 = vld [vmem:[%s200 + $0xe0] sm:$0xff]
        %v271 = vld [vmem:[%s200 + $0xe8] sm:$0xff]
        %v272 = vld [vmem:[%s200 + $0xf0] sm:$0xff]
        %v273 = vld [vmem:[%s200 + $0xf8] sm:$0xff]
        %v274 = vld [vmem:[%s200 + $0x100] sm:$0xff]
        %v275 = vld [vmem:[%s200 + $0x108] sm:$0xff]
        %v276 = vld [vmem:[%s200 + $0x110] sm:$0xff]
        %v277 = vld [vmem:[%s200 + $0x118] sm:$0xff]
        %v278 = vld [vmem:[%s200 + $0x120] sm:$0xff]
        %v279 = vld [vmem:[%s200 + $0x128] sm:$0xf]
        %v280 = vld [vmem:[%s200 + $0x12c] sm:$0xff]
        %v281 = vld [vmem:[%s200 + $0x134] sm:$0xff]
        %v282 = vld [vmem:[%s200 + $0x13c] sm:$0xff]
        %v283 = vld [vmem:[%s200 + $0x144] sm:$0xff]
        %v284 = vld [vmem:[%s200 + $0x14c] sm:$0xff]
        %v285 = vld [vmem:[%s200 + $0x154] sm:$0xff]
        %v286 = vld [vmem:[%s200 + $0x15c] sm:$0xff]
        %v287 = vld [vmem:[%s200 + $0x164] sm:$0xff]
        %v288 = vld [vmem:[%s200 + $0x16c] sm:$0xff]
        %v289 = vld [vmem:[%s200 + $0x174] sm:$0xff]
        %v290 = vld [vmem:[%s200 + $0x17c] sm:$0xff]
        %v291 = vld [vmem:[%s200 + $0x184] sm:$0xff]
        %v292 = vld [vmem:[%s200 + $0x18c] sm:$0xf]
        %v293 = vld [vmem:[%s200 + $0x190] sm:$0xff]
        %v294 = vld [vmem:[%s200 + $0x198] sm:$0xff]
        %v295 = vld [vmem:[%s200 + $0x1a0] sm:$0xff]
        %v296 = vld [vmem:[%s200 + $0x1a8] sm:$0xff]
        %v297 = vld [vmem:[%s200 + $0x1b0] sm:$0xff]
        %v298 = vld [vmem:[%s200 + $0x1b8] sm:$0xff]
        %v299 = vld [vmem:[%s200 + $0x1c0] sm:$0xff]
        %v300 = vld [vmem:[%s200 + $0x1c8] sm:$0xff]
        %v301 = vld [vmem:[%s200 + $0x1d0] sm:$0xff]
        %v302 = vld [vmem:[%s200 + $0x1d8] sm:$0xff]
        %v303 = vld [vmem:[%s200 + $0x1e0] sm:$0xff]
        %v304 = vld [vmem:[%s200 + $0x1e8] sm:$0xff]
        %v305 = vld [vmem:[%s200 + $0x1f0] sm:$0xf]
        %v306 = vld [vmem:[%s200 + $0x1f4] sm:$0xff]
        %v307 = vld [vmem:[%s200 + $0x1fc] sm:$0xff]
        %v308 = vld [vmem:[%s200 + $0x204] sm:$0xff]
        %v309 = vld [vmem:[%s200 + $0x20c] sm:$0xff]
        %v310 = vld [vmem:[%s200 + $0x214] sm:$0xff]
        %v311 = vld [vmem:[%s200 + $0x21c] sm:$0xff]
        %v312 = vld [vmem:[%s200 + $0x224] sm:$0xff]
        %v313 = vld [vmem:[%s200 + $0x22c] sm:$0xff]
        %v314 = vld [vmem:[%s200 + $0x234] sm:$0xff]
        %v315 = vld [vmem:[%s200 + $0x23c] sm:$0xff]
        %v316 = vld [vmem:[%s200 + $0x244] sm:$0xff]
        %v317 = vld [vmem:[%s200 + $0x24c] sm:$0xff]
        %v318 = vld [vmem:[%s200 + $0x254] sm:$0xf]
        %v319 = vld [vmem:[%s200 + $0x258] sm:$0xff]
        %v320 = vld [vmem:[%s200 + $0x260] sm:$0xff]
        %v321 = vld [vmem:[%s200 + $0x268] sm:$0xff]
        %v322 = vld [vmem:[%s200 + $0x270] sm:$0xff]
        %v323 = vld [vmem:[%s200 + $0x278] sm:$0xff]
        %v324 = vld [vmem:[%s200 + $0x280] sm:$0xff]
        %v325 = vld [vmem:[%s200 + $0x288] sm:$0xff]
        %v326 = vld [vmem:[%s200 + $0x290] sm:$0xff]
        %v327 = vld [vmem:[%s200 + $0x298] sm:$0xff]
        %v328 = vld [vmem:[%s200 + $0x2a0] sm:$0xff]
        %v329 = vld [vmem:[%s200 + $0x2a8] sm:$0xff]
        %v330 = vld [vmem:[%s200 + $0x2b0] sm:$0xff]
        %v331 = vld [vmem:[%s200 + $0x2b8] sm:$0xf]
        %v332 = vld [vmem:[%s200 + $0x2bc] sm:$0xff]
        %v333 = vld [vmem:[%s200 + $0x2c4] sm:$0xff]
        %v334 = vld [vmem:[%s200 + $0x2cc] sm:$0xff]
        %v335 = vld [vmem:[%s200 + $0x2d4] sm:$0xff]
        %v336 = vld [vmem:[%s200 + $0x2dc] sm:$0xff]
        %v337 = vld [vmem:[%s200 + $0x2e4] sm:$0xff]
        %v338 = vld [vmem:[%s200 + $0x2ec] sm:$0xff]
        %v339 = vld [vmem:[%s200 + $0x2f4] sm:$0xff]
        %v340 = vld [vmem:[%s200 + $0x2fc] sm:$0xff]
        %v341 = vld [vmem:[%s200 + $0x304] sm:$0xff]
        %v342 = vld [vmem:[%s200 + $0x30c] sm:$0xff]
        %v343 = vld [vmem:[%s200 + $0x314] sm:$0xff]
        %v344 = vld [vmem:[%s200 + $0x31c] sm:$0xf]
        %v345 = vld [vmem:[%s200 + $0x320] sm:$0xff]
        %v346 = vld [vmem:[%s200 + $0x328] sm:$0xff]
        %v347 = vld [vmem:[%s200 + $0x330] sm:$0xff]
        %v348 = vld [vmem:[%s200 + $0x338] sm:$0xff]
        %v349 = vld [vmem:[%s200 + $0x340] sm:$0xff]
        %v350 = vld [vmem:[%s200 + $0x348] sm:$0xff]
        %v351 = vld [vmem:[%s200 + $0x350] sm:$0xff]
        %v352 = vld [vmem:[%s200 + $0x358] sm:$0xff]
        %v353 = vld [vmem:[%s200 + $0x360] sm:$0xff]
        %v354 = vld [vmem:[%s200 + $0x368] sm:$0xff]
        %v355 = vld [vmem:[%s200 + $0x370] sm:$0xff]
        %v356 = vld [vmem:[%s200 + $0x378] sm:$0xff]
        %v357 = vld [vmem:[%s200 + $0x380] sm:$0xf]
        %v358 = vld [vmem:[%s200 + $0x384] sm:$0xff]
        %v359 = vld [vmem:[%s200 + $0x38c] sm:$0xff]
        %v360 = vld [vmem:[%s200 + $0x394] sm:$0xff]
        %v361 = vld [vmem:[%s200 + $0x39c] sm:$0xff]
        %v362 = vld [vmem:[%s200 + $0x3a4] sm:$0xff]
        %v363 = vld [vmem:[%s200 + $0x3ac] sm:$0xff]
        %v364 = vld [vmem:[%s200 + $0x3b4] sm:$0xff]
        %v365 = vld [vmem:[%s200 + $0x3bc] sm:$0xff]
        %v366 = vld [vmem:[%s200 + $0x3c4] sm:$0xff]
        %v367 = vld [vmem:[%s200 + $0x3cc] sm:$0xff]
        %v368 = vld [vmem:[%s200 + $0x3d4] sm:$0xff]
        %v369 = vld [vmem:[%s200 + $0x3dc] sm:$0xff]
        %v370 = vld [vmem:[%s200 + $0x3e4] sm:$0xf]
        %v371 = vld [vmem:[%s200 + $0x3e8] sm:$0xff]
        %v372 = vld [vmem:[%s200 + $0x3f0] sm:$0xff]
        %v373 = vld [vmem:[%s200 + $0x3f8] sm:$0xff]
        %v374 = vld [vmem:[%s200 + $0x400] sm:$0xff]
        %v375 = vld [vmem:[%s200 + $0x408] sm:$0xff]
        %v376 = vld [vmem:[%s200 + $0x410] sm:$0xff]
        %v377 = vld [vmem:[%s200 + $0x418] sm:$0xff]
        %v378 = vld [vmem:[%s200 + $0x420] sm:$0xff]
        %v379 = vld [vmem:[%s200 + $0x428] sm:$0xff]
        %v380 = vld [vmem:[%s200 + $0x430] sm:$0xff]
        %v381 = vld [vmem:[%s200 + $0x438] sm:$0xff]
        %v382 = vld [vmem:[%s200 + $0x440] sm:$0xff]
        %v383 = vld [vmem:[%s200 + $0x448] sm:$0xf]
        %v384 = vld [vmem:[%s200 + $0x44c] sm:$0xff]
        %v385 = vld [vmem:[%s200 + $0x454] sm:$0xff]
        %v386 = vld [vmem:[%s200 + $0x45c] sm:$0xff]
        %v387 = vld [vmem:[%s200 + $0x464] sm:$0xff]
        %v388 = vld [vmem:[%s200 + $0x46c] sm:$0xff]
        %v389 = vld [vmem:[%s200 + $0x474] sm:$0xff]
        %v390 = vld [vmem:[%s200 + $0x47c] sm:$0xff]
        %v391 = vld [vmem:[%s200 + $0x484] sm:$0xff]
        %v392 = vld [vmem:[%s200 + $0x48c] sm:$0xff]
        %v393 = vld [vmem:[%s200 + $0x494] sm:$0xff]
        %v394 = vld [vmem:[%s200 + $0x49c] sm:$0xff]
        %v395 = vld [vmem:[%s200 + $0x4a4] sm:$0xff]
        %v396 = vld [vmem:[%s200 + $0x4ac] sm:$0xf]
        %v397 = vld [vmem:[%s200 + $0x4b0] sm:$0x33]
        %v398 = vld [vmem:[%s200 + $0x4b8] sm:$0x33]
        %v399 = vld [vmem:[%s200 + $0x4c0] sm:$0x33]
        %v400 = vld [vmem:[%s200 + $0x4c8] sm:$0x33]
        %v401 = vld [vmem:[%s200 + $0x4d0] sm:$0x33]
        %v402 = vld [vmem:[%s200 + $0x4d8] sm:$0x33]
        %v403 = vld [vmem:[%s200 + $0x4e0] sm:$0x33]
        %v404 = vld [vmem:[%s200 + $0x4e8] sm:$0x33]
        %v405 = vld [vmem:[%s200 + $0x4f0] sm:$0x33]
        %v406 = vld [vmem:[%s200 + $0x4f8] sm:$0x33]
        %v407 = vld [vmem:[%s200 + $0x500] sm:$0x33]
        %v408 = vld [vmem:[%s200 + $0x508] sm:$0x33]
        %v409 = vld [vmem:[%s200 + $0x510] sm:$0x3]
        %v414 = vcombine.high %v237, %v237
        %v416 = vunpack.c.l.s4 1966171168
        %v417 = vunpack.c.0.s8 %v416
        %v418 = vlaneseq
        %v419 = vshrl.u32 %v418, 7
        %v420 = vsub.s32 %v417, %v419
        %v421 = vrot.slane %v237, %v420
        %v423 = vunpack.c.l.s4 1966171168
        %v424 = vunpack.c.0.s8 %v423
        %v425 = vlaneseq
        %v426 = vshrl.u32 %v425, 7
        %v427 = vsub.s32 %v424, %v426
        %v428 = vrot.slane %v414, %v427
        %v429 = vcombine.high %v421, %v421
        %v430 = vcombine.high %v428, %v428
        %v432 = vunpack.c.l.s4 1966171168
        %v433 = vunpack.c.0.s8 %v432
        %v434 = vlaneseq
        %v435 = vshrl.u32 %v434, 7
        %v436 = vsub.s32 %v433, %v435
        %v437 = vrot.slane %v421, %v436
        %v439 = vunpack.c.l.s4 1966171168
        %v440 = vunpack.c.0.s8 %v439
        %v441 = vlaneseq
        %v442 = vshrl.u32 %v441, 7
        %v443 = vsub.s32 %v440, %v442
        %v444 = vrot.slane %v428, %v443
        %v446 = vunpack.c.l.s4 1966171168
        %v447 = vunpack.c.0.s8 %v446
        %v448 = vlaneseq
        %v449 = vshrl.u32 %v448, 7
        %v450 = vsub.s32 %v447, %v449
        %v451 = vrot.slane %v429, %v450
        %v453 = vunpack.c.l.s4 1966171168
        %v454 = vunpack.c.0.s8 %v453
        %v455 = vlaneseq
        %v456 = vshrl.u32 %v455, 7
        %v457 = vsub.s32 %v454, %v456
        %v458 = vrot.slane %v430, %v457
        %v459 = vcombine.high %v437, %v437
        %v460 = vcombine.high %v444, %v444
        %v461 = vcombine.high %v451, %v451
        %v462 = vcombine.high %v458, %v458
        %v463 = vcombine.high %v238, %v238
        %v465 = vunpack.c.l.s4 1966171168
        %v466 = vunpack.c.0.s8 %v465
        %v467 = vlaneseq
        %v468 = vshrl.u32 %v467, 7
        %v469 = vsub.s32 %v466, %v468
        %v470 = vrot.slane %v238, %v469
        %v472 = vunpack.c.l.s4 1966171168
        %v473 = vunpack.c.0.s8 %v472
        %v474 = vlaneseq
        %v475 = vshrl.u32 %v474, 7
        %v476 = vsub.s32 %v473, %v475
        %v477 = vrot.slane %v463, %v476
        %v478 = vcombine.high %v470, %v470
        %v479 = vcombine.high %v477, %v477
        %v481 = vunpack.c.l.s4 1966171168
        %v482 = vunpack.c.0.s8 %v481
        %v483 = vlaneseq
        %v484 = vshrl.u32 %v483, 7
        %v485 = vsub.s32 %v482, %v484
        %v486 = vrot.slane %v470, %v485
        %v488 = vunpack.c.l.s4 1966171168
        %v489 = vunpack.c.0.s8 %v488
        %v490 = vlaneseq
        %v491 = vshrl.u32 %v490, 7
        %v492 = vsub.s32 %v489, %v491
        %v493 = vrot.slane %v477, %v492
        %v495 = vunpack.c.l.s4 1966171168
        %v496 = vunpack.c.0.s8 %v495
        %v497 = vlaneseq
        %v498 = vshrl.u32 %v497, 7
        %v499 = vsub.s32 %v496, %v498
        %v500 = vrot.slane %v478, %v499
        %v502 = vunpack.c.l.s4 1966171168
        %v503 = vunpack.c.0.s8 %v502
        %v504 = vlaneseq
        %v505 = vshrl.u32 %v504, 7
        %v506 = vsub.s32 %v503, %v505
        %v507 = vrot.slane %v479, %v506
        %v508 = vcombine.high %v486, %v486
        %v509 = vcombine.high %v493, %v493
        %v510 = vcombine.high %v500, %v500
        %v511 = vcombine.high %v507, %v507
        %v512 = vcombine.high %v239, %v239
        %v514 = vunpack.c.l.s4 1966171168
        %v515 = vunpack.c.0.s8 %v514
        %v516 = vlaneseq
        %v517 = vshrl.u32 %v516, 7
        %v518 = vsub.s32 %v515, %v517
        %v519 = vrot.slane %v239, %v518
        %v521 = vunpack.c.l.s4 1966171168
        %v522 = vunpack.c.0.s8 %v521
        %v523 = vlaneseq
        %v524 = vshrl.u32 %v523, 7
        %v525 = vsub.s32 %v522, %v524
        %v526 = vrot.slane %v512, %v525
        %v527 = vcombine.high %v519, %v519
        %v528 = vcombine.high %v526, %v526
        %v530 = vunpack.c.l.s4 1966171168
        %v531 = vunpack.c.0.s8 %v530
        %v532 = vlaneseq
        %v533 = vshrl.u32 %v532, 7
        %v534 = vsub.s32 %v531, %v533
        %v535 = vrot.slane %v519, %v534
        %v537 = vunpack.c.l.s4 1966171168
        %v538 = vunpack.c.0.s8 %v537
        %v539 = vlaneseq
        %v540 = vshrl.u32 %v539, 7
        %v541 = vsub.s32 %v538, %v540
        %v542 = vrot.slane %v526, %v541
        %v544 = vunpack.c.l.s4 1966171168
        %v545 = vunpack.c.0.s8 %v544
        %v546 = vlaneseq
        %v547 = vshrl.u32 %v546, 7
        %v548 = vsub.s32 %v545, %v547
        %v549 = vrot.slane %v527, %v548
        %v551 = vunpack.c.l.s4 1966171168
        %v552 = vunpack.c.0.s8 %v551
        %v553 = vlaneseq
        %v554 = vshrl.u32 %v553, 7
        %v555 = vsub.s32 %v552, %v554
        %v556 = vrot.slane %v528, %v555
        %v557 = vcombine.high %v535, %v535
        %v558 = vcombine.high %v542, %v542
        %v559 = vcombine.high %v549, %v549
        %v560 = vcombine.high %v556, %v556
        %v562 = vunpack.c.l.s4 1966171168
        %v563 = vunpack.c.0.s8 %v562
        %v564 = vlaneseq
        %v565 = vshrl.u32 %v564, 7
        %v566 = vsub.s32 %v563, %v565
        %v567 = vrot.slane %v240, %v566
        %v569 = vunpack.c.l.s4 1966171168
        %v570 = vunpack.c.0.s8 %v569
        %v571 = vlaneseq
        %v572 = vshrl.u32 %v571, 7
        %v573 = vsub.s32 %v570, %v572
        %v574 = vrot.slane %v567, %v573
        %v769 = vunpack.c.l.b16 %v241
        %v770 = vunpack.c.h.b16 %v241
        %v771 = vunpack.c.l.b16 %v242
        %v772 = vunpack.c.h.b16 %v242
        %v773 = vunpack.c.l.b16 %v243
        %v774 = vunpack.c.h.b16 %v243
        %v775 = vunpack.c.l.b16 %v244
        %v776 = vunpack.c.h.b16 %v244
        %v777 = vunpack.c.l.b16 %v245
        %v778 = vunpack.c.h.b16 %v245
        %v779 = vunpack.c.l.b16 %v246
        %v780 = vunpack.c.h.b16 %v246
        %v781 = vunpack.c.l.b16 %v247
        %v782 = vunpack.c.h.b16 %v247
        %v783 = vunpack.c.l.b16 %v248
        %v784 = vunpack.c.h.b16 %v248
        %v785 = vunpack.c.l.b16 %v249
        %v786 = vunpack.c.h.b16 %v249
        %v787 = vunpack.c.l.b16 %v250
        %v788 = vunpack.c.h.b16 %v250
        %v789 = vunpack.c.l.b16 %v251
        %v790 = vunpack.c.h.b16 %v251
        %v791 = vunpack.c.l.b16 %v252
        %v792 = vunpack.c.h.b16 %v252
        %v793 = vunpack.c.l.b16 %v253
        %v794 = vunpack.c.l.b16 %v254
        %v795 = vunpack.c.h.b16 %v254
        %v796 = vunpack.c.l.b16 %v255
        %v797 = vunpack.c.h.b16 %v255
        %v798 = vunpack.c.l.b16 %v256
        %v799 = vunpack.c.h.b16 %v256
        %v800 = vunpack.c.l.b16 %v257
        %v801 = vunpack.c.h.b16 %v257
        %v802 = vunpack.c.l.b16 %v258
        %v803 = vunpack.c.h.b16 %v258
        %v804 = vunpack.c.l.b16 %v259
        %v805 = vunpack.c.h.b16 %v259
        %v806 = vunpack.c.l.b16 %v260
        %v807 = vunpack.c.h.b16 %v260
        %v808 = vunpack.c.l.b16 %v261
        %v809 = vunpack.c.h.b16 %v261
        %v810 = vunpack.c.l.b16 %v262
        %v811 = vunpack.c.h.b16 %v262
        %v812 = vunpack.c.l.b16 %v263
        %v813 = vunpack.c.h.b16 %v263
        %v814 = vunpack.c.l.b16 %v264
        %v815 = vunpack.c.h.b16 %v264
        %v816 = vunpack.c.l.b16 %v265
        %v817 = vunpack.c.h.b16 %v265
        %v818 = vunpack.c.l.b16 %v266
        %v819 = vunpack.c.l.b16 %v267
        %v820 = vunpack.c.h.b16 %v267
        %v821 = vunpack.c.l.b16 %v268
        %v822 = vunpack.c.h.b16 %v268
        %v823 = vunpack.c.l.b16 %v269
        %v824 = vunpack.c.h.b16 %v269
        %v825 = vunpack.c.l.b16 %v270
        %v826 = vunpack.c.h.b16 %v270
        %v827 = vunpack.c.l.b16 %v271
        %v828 = vunpack.c.h.b16 %v271
        %v829 = vunpack.c.l.b16 %v272
        %v830 = vunpack.c.h.b16 %v272
        %v831 = vunpack.c.l.b16 %v273
        %v832 = vunpack.c.h.b16 %v273
        %v833 = vunpack.c.l.b16 %v274
        %v834 = vunpack.c.h.b16 %v274
        %v835 = vunpack.c.l.b16 %v275
        %v836 = vunpack.c.h.b16 %v275
        %v837 = vunpack.c.l.b16 %v276
        %v838 = vunpack.c.h.b16 %v276
        %v839 = vunpack.c.l.b16 %v277
        %v840 = vunpack.c.h.b16 %v277
        %v841 = vunpack.c.l.b16 %v278
        %v842 = vunpack.c.h.b16 %v278
        %v843 = vunpack.c.l.b16 %v279
        %v844 = vunpack.c.l.b16 %v280
        %v845 = vunpack.c.h.b16 %v280
        %v846 = vunpack.c.l.b16 %v281
        %v847 = vunpack.c.h.b16 %v281
        %v848 = vunpack.c.l.b16 %v282
        %v849 = vunpack.c.h.b16 %v282
        %v850 = vunpack.c.l.b16 %v283
        %v851 = vunpack.c.h.b16 %v283
        %v852 = vunpack.c.l.b16 %v284
        %v853 = vunpack.c.h.b16 %v284
        %v854 = vunpack.c.l.b16 %v285
        %v855 = vunpack.c.h.b16 %v285
        %v856 = vunpack.c.l.b16 %v286
        %v857 = vunpack.c.h.b16 %v286
        %v858 = vunpack.c.l.b16 %v287
        %v859 = vunpack.c.h.b16 %v287
        %v860 = vunpack.c.l.b16 %v288
        %v861 = vunpack.c.h.b16 %v288
        %v862 = vunpack.c.l.b16 %v289
        %v863 = vunpack.c.h.b16 %v289
        %v864 = vunpack.c.l.b16 %v290
        %v865 = vunpack.c.h.b16 %v290
        %v866 = vunpack.c.l.b16 %v291
        %v867 = vunpack.c.h.b16 %v291
        %v868 = vunpack.c.l.b16 %v292
        %v869 = vunpack.c.l.b16 %v293
        %v870 = vunpack.c.h.b16 %v293
        %v871 = vunpack.c.l.b16 %v294
        %v872 = vunpack.c.h.b16 %v294
        %v873 = vunpack.c.l.b16 %v295
        %v874 = vunpack.c.h.b16 %v295
        %v875 = vunpack.c.l.b16 %v296
        %v876 = vunpack.c.h.b16 %v296
        %v877 = vunpack.c.l.b16 %v297
        %v878 = vunpack.c.h.b16 %v297
        %v879 = vunpack.c.l.b16 %v298
        %v880 = vunpack.c.h.b16 %v298
        %v881 = vunpack.c.l.b16 %v299
        %v882 = vunpack.c.h.b16 %v299
        %v883 = vunpack.c.l.b16 %v300
        %v884 = vunpack.c.h.b16 %v300
        %v885 = vunpack.c.l.b16 %v301
        %v886 = vunpack.c.h.b16 %v301
        %v887 = vunpack.c.l.b16 %v302
        %v888 = vunpack.c.h.b16 %v302
        %v889 = vunpack.c.l.b16 %v303
        %v890 = vunpack.c.h.b16 %v303
        %v891 = vunpack.c.l.b16 %v304
        %v892 = vunpack.c.h.b16 %v304
        %v893 = vunpack.c.l.b16 %v305
        %v894 = vunpack.c.l.b16 %v306
        %v895 = vunpack.c.h.b16 %v306
        %v896 = vunpack.c.l.b16 %v307
        %v897 = vunpack.c.h.b16 %v307
        %v898 = vunpack.c.l.b16 %v308
        %v899 = vunpack.c.h.b16 %v308
        %v900 = vunpack.c.l.b16 %v309
        %v901 = vunpack.c.h.b16 %v309
        %v902 = vunpack.c.l.b16 %v310
        %v903 = vunpack.c.h.b16 %v310
        %v904 = vunpack.c.l.b16 %v311
        %v905 = vunpack.c.h.b16 %v311
        %v906 = vunpack.c.l.b16 %v312
        %v907 = vunpack.c.h.b16 %v312
        %v908 = vunpack.c.l.b16 %v313
        %v909 = vunpack.c.h.b16 %v313
        %v910 = vunpack.c.l.b16 %v314
        %v911 = vunpack.c.h.b16 %v314
        %v912 = vunpack.c.l.b16 %v315
        %v913 = vunpack.c.h.b16 %v315
        %v914 = vunpack.c.l.b16 %v316
        %v915 = vunpack.c.h.b16 %v316
        %v916 = vunpack.c.l.b16 %v317
        %v917 = vunpack.c.h.b16 %v317
        %v918 = vunpack.c.l.b16 %v318
        %v919 = vunpack.c.l.b16 %v319
        %v920 = vunpack.c.h.b16 %v319
        %v921 = vunpack.c.l.b16 %v320
        %v922 = vunpack.c.h.b16 %v320
        %v923 = vunpack.c.l.b16 %v321
        %v924 = vunpack.c.h.b16 %v321
        %v925 = vunpack.c.l.b16 %v322
        %v926 = vunpack.c.h.b16 %v322
        %v927 = vunpack.c.l.b16 %v323
        %v928 = vunpack.c.h.b16 %v323
        %v929 = vunpack.c.l.b16 %v324
        %v930 = vunpack.c.h.b16 %v324
        %v931 = vunpack.c.l.b16 %v325
        %v932 = vunpack.c.h.b16 %v325
        %v933 = vunpack.c.l.b16 %v326
        %v934 = vunpack.c.h.b16 %v326
        %v935 = vunpack.c.l.b16 %v327
        %v936 = vunpack.c.h.b16 %v327
        %v937 = vunpack.c.l.b16 %v328
        %v938 = vunpack.c.h.b16 %v328
        %v939 = vunpack.c.l.b16 %v329
        %v940 = vunpack.c.h.b16 %v329
        %v941 = vunpack.c.l.b16 %v330
        %v942 = vunpack.c.h.b16 %v330
        %v943 = vunpack.c.l.b16 %v331
        %v944 = vunpack.c.l.b16 %v332
        %v945 = vunpack.c.h.b16 %v332
        %v946 = vunpack.c.l.b16 %v333
        %v947 = vunpack.c.h.b16 %v333
        %v948 = vunpack.c.l.b16 %v334
        %v949 = vunpack.c.h.b16 %v334
        %v950 = vunpack.c.l.b16 %v335
        %v951 = vunpack.c.h.b16 %v335
        %v952 = vunpack.c.l.b16 %v336
        %v953 = vunpack.c.h.b16 %v336
        %v954 = vunpack.c.l.b16 %v337
        %v955 = vunpack.c.h.b16 %v337
        %v956 = vunpack.c.l.b16 %v338
        %v957 = vunpack.c.h.b16 %v338
        %v958 = vunpack.c.l.b16 %v339
        %v959 = vunpack.c.h.b16 %v339
        %v960 = vunpack.c.l.b16 %v340
        %v961 = vunpack.c.h.b16 %v340
        %v962 = vunpack.c.l.b16 %v341
        %v963 = vunpack.c.h.b16 %v341
        %v964 = vunpack.c.l.b16 %v342
        %v965 = vunpack.c.h.b16 %v342
        %v966 = vunpack.c.l.b16 %v343
        %v967 = vunpack.c.h.b16 %v343
        %v968 = vunpack.c.l.b16 %v344
        %v969 = vunpack.c.l.b16 %v345
        %v970 = vunpack.c.h.b16 %v345
        %v971 = vunpack.c.l.b16 %v346
        %v972 = vunpack.c.h.b16 %v346
        %v973 = vunpack.c.l.b16 %v347
        %v974 = vunpack.c.h.b16 %v347
        %v975 = vunpack.c.l.b16 %v348
        %v976 = vunpack.c.h.b16 %v348
        %v977 = vunpack.c.l.b16 %v349
        %v978 = vunpack.c.h.b16 %v349
        %v979 = vunpack.c.l.b16 %v350
        %v980 = vunpack.c.h.b16 %v350
        %v981 = vunpack.c.l.b16 %v351
        %v982 = vunpack.c.h.b16 %v351
        %v983 = vunpack.c.l.b16 %v352
        %v984 = vunpack.c.h.b16 %v352
        %v985 = vunpack.c.l.b16 %v353
        %v986 = vunpack.c.h.b16 %v353
        %v987 = vunpack.c.l.b16 %v354
        %v988 = vunpack.c.h.b16 %v354
        %v989 = vunpack.c.l.b16 %v355
        %v990 = vunpack.c.h.b16 %v355
        %v991 = vunpack.c.l.b16 %v356
        %v992 = vunpack.c.h.b16 %v356
        %v993 = vunpack.c.l.b16 %v357
        %v994 = vunpack.c.l.b16 %v358
        %v995 = vunpack.c.h.b16 %v358
        %v996 = vunpack.c.l.b16 %v359
        %v997 = vunpack.c.h.b16 %v359
        %v998 = vunpack.c.l.b16 %v360
        %v999 = vunpack.c.h.b16 %v360
        %v1000 = vunpack.c.l.b16 %v361
        %v1001 = vunpack.c.h.b16 %v361
        %v1002 = vunpack.c.l.b16 %v362
        %v1003 = vunpack.c.h.b16 %v362
        %v1004 = vunpack.c.l.b16 %v363
        %v1005 = vunpack.c.h.b16 %v363
        %v1006 = vunpack.c.l.b16 %v364
        %v1007 = vunpack.c.h.b16 %v364
        %v1008 = vunpack.c.l.b16 %v365
        %v1009 = vunpack.c.h.b16 %v365
        %v1010 = vunpack.c.l.b16 %v366
        %v1011 = vunpack.c.h.b16 %v366
        %v1012 = vunpack.c.l.b16 %v367
        %v1013 = vunpack.c.h.b16 %v367
        %v1014 = vunpack.c.l.b16 %v368
        %v1015 = vunpack.c.h.b16 %v368
        %v1016 = vunpack.c.l.b16 %v369
        %v1017 = vunpack.c.h.b16 %v369
        %v1018 = vunpack.c.l.b16 %v370
        %v1019 = vunpack.c.l.b16 %v371
        %v1020 = vunpack.c.h.b16 %v371
        %v1021 = vunpack.c.l.b16 %v372
        %v1022 = vunpack.c.h.b16 %v372
        %v1023 = vunpack.c.l.b16 %v373
        %v1024 = vunpack.c.h.b16 %v373
        %v1025 = vunpack.c.l.b16 %v374
        %v1026 = vunpack.c.h.b16 %v374
        %v1027 = vunpack.c.l.b16 %v375
        %v1028 = vunpack.c.h.b16 %v375
        %v1029 = vunpack.c.l.b16 %v376
        %v1030 = vunpack.c.h.b16 %v376
        %v1031 = vunpack.c.l.b16 %v377
        %v1032 = vunpack.c.h.b16 %v377
        %v1033 = vunpack.c.l.b16 %v378
        %v1034 = vunpack.c.h.b16 %v378
        %v1035 = vunpack.c.l.b16 %v379
        %v1036 = vunpack.c.h.b16 %v379
        %v1037 = vunpack.c.l.b16 %v380
        %v1038 = vunpack.c.h.b16 %v380
        %v1039 = vunpack.c.l.b16 %v381
        %v1040 = vunpack.c.h.b16 %v381
        %v1041 = vunpack.c.l.b16 %v382
        %v1042 = vunpack.c.h.b16 %v382
        %v1043 = vunpack.c.l.b16 %v383
        %v1044 = vunpack.c.l.b16 %v384
        %v1045 = vunpack.c.h.b16 %v384
        %v1046 = vunpack.c.l.b16 %v385
        %v1047 = vunpack.c.h.b16 %v385
        %v1048 = vunpack.c.l.b16 %v386
        %v1049 = vunpack.c.h.b16 %v386
        %v1050 = vunpack.c.l.b16 %v387
        %v1051 = vunpack.c.h.b16 %v387
        %v1052 = vunpack.c.l.b16 %v388
        %v1053 = vunpack.c.h.b16 %v388
        %v1054 = vunpack.c.l.b16 %v389
        %v1055 = vunpack.c.h.b16 %v389
        %v1056 = vunpack.c.l.b16 %v390
        %v1057 = vunpack.c.h.b16 %v390
        %v1058 = vunpack.c.l.b16 %v391
        %v1059 = vunpack.c.h.b16 %v391
        %v1060 = vunpack.c.l.b16 %v392
        %v1061 = vunpack.c.h.b16 %v392
        %v1062 = vunpack.c.l.b16 %v393
        %v1063 = vunpack.c.h.b16 %v393
        %v1064 = vunpack.c.l.b16 %v394
        %v1065 = vunpack.c.h.b16 %v394
        %v1066 = vunpack.c.l.b16 %v395
        %v1067 = vunpack.c.h.b16 %v395
        %v1068 = vunpack.c.l.b16 %v396
        %v1069 = vunpack.c.l.b16 %v397
        %v1070 = vunpack.c.h.b16 %v397
        %v1071 = vunpack.c.l.b16 %v398
        %v1072 = vunpack.c.h.b16 %v398
        %v1073 = vunpack.c.l.b16 %v399
        %v1074 = vunpack.c.h.b16 %v399
        %v1075 = vunpack.c.l.b16 %v400
        %v1076 = vunpack.c.h.b16 %v400
        %v1077 = vunpack.c.l.b16 %v401
        %v1078 = vunpack.c.h.b16 %v401
        %v1079 = vunpack.c.l.b16 %v402
        %v1080 = vunpack.c.h.b16 %v402
        %v1081 = vunpack.c.l.b16 %v403
        %v1082 = vunpack.c.h.b16 %v403
        %v1083 = vunpack.c.l.b16 %v404
        %v1084 = vunpack.c.h.b16 %v404
        %v1085 = vunpack.c.l.b16 %v405
        %v1086 = vunpack.c.h.b16 %v405
        %v1087 = vunpack.c.l.b16 %v406
        %v1088 = vunpack.c.h.b16 %v406
        %v1089 = vunpack.c.l.b16 %v407
        %v1090 = vunpack.c.h.b16 %v407
        %v1091 = vunpack.c.l.b16 %v408
        %v1092 = vunpack.c.h.b16 %v408
        %v1093 = vunpack.c.l.b16 %v409
        %v1094 = vpack.c.b16 %v794, %v769
        %v1095 = vpack.c.b16 %v795, %v770
        %v1096 = vpack.c.b16 %v796, %v771
        %v1097 = vpack.c.b16 %v797, %v772
        %v1098 = vpack.c.b16 %v798, %v773
        %v1099 = vpack.c.b16 %v799, %v774
        %v1100 = vpack.c.b16 %v800, %v775
        %v1101 = vpack.c.b16 %v801, %v776
        %v1102 = vpack.c.b16 %v802, %v777
        %v1103 = vpack.c.b16 %v803, %v778
        %v1104 = vpack.c.b16 %v804, %v779
        %v1105 = vpack.c.b16 %v805, %v780
        %v1106 = vpack.c.b16 %v806, %v781
        %v1107 = vpack.c.b16 %v807, %v782
        %v1108 = vpack.c.b16 %v808, %v783
        %v1109 = vpack.c.b16 %v809, %v784
        %v1110 = vpack.c.b16 %v810, %v785
        %v1111 = vpack.c.b16 %v811, %v786
        %v1112 = vpack.c.b16 %v812, %v787
        %v1113 = vpack.c.b16 %v813, %v788
        %v1114 = vpack.c.b16 %v814, %v789
        %v1115 = vpack.c.b16 %v815, %v790
        %v1116 = vpack.c.b16 %v816, %v791
        %v1117 = vpack.c.b16 %v817, %v792
        %v1118 = vpack.c.b16 %v818, %v793
        %v1119 = vpack.c.b16 %v844, %v819
        %v1120 = vpack.c.b16 %v845, %v820
        %v1121 = vpack.c.b16 %v846, %v821
        %v1122 = vpack.c.b16 %v847, %v822
        %v1123 = vpack.c.b16 %v848, %v823
        %v1124 = vpack.c.b16 %v849, %v824
        %v1125 = vpack.c.b16 %v850, %v825
        %v1126 = vpack.c.b16 %v851, %v826
        %v1127 = vpack.c.b16 %v852, %v827
        %v1128 = vpack.c.b16 %v853, %v828
        %v1129 = vpack.c.b16 %v854, %v829
        %v1130 = vpack.c.b16 %v855, %v830
        %v1131 = vpack.c.b16 %v856, %v831
        %v1132 = vpack.c.b16 %v857, %v832
        %v1133 = vpack.c.b16 %v858, %v833
        %v1134 = vpack.c.b16 %v859, %v834
        %v1135 = vpack.c.b16 %v860, %v835
        %v1136 = vpack.c.b16 %v861, %v836
        %v1137 = vpack.c.b16 %v862, %v837
        %v1138 = vpack.c.b16 %v863, %v838
        %v1139 = vpack.c.b16 %v864, %v839
        %v1140 = vpack.c.b16 %v865, %v840
        %v1141 = vpack.c.b16 %v866, %v841
        %v1142 = vpack.c.b16 %v867, %v842
        %v1143 = vpack.c.b16 %v868, %v843
        %v1144 = vpack.c.b16 %v894, %v869
        %v1145 = vpack.c.b16 %v895, %v870
        %v1146 = vpack.c.b16 %v896, %v871
        %v1147 = vpack.c.b16 %v897, %v872
        %v1148 = vpack.c.b16 %v898, %v873
        %v1149 = vpack.c.b16 %v899, %v874
        %v1150 = vpack.c.b16 %v900, %v875
        %v1151 = vpack.c.b16 %v901, %v876
        %v1152 = vpack.c.b16 %v902, %v877
        %v1153 = vpack.c.b16 %v903, %v878
        %v1154 = vpack.c.b16 %v904, %v879
        %v1155 = vpack.c.b16 %v905, %v880
        %v1156 = vpack.c.b16 %v906, %v881
        %v1157 = vpack.c.b16 %v907, %v882
        %v1158 = vpack.c.b16 %v908, %v883
        %v1159 = vpack.c.b16 %v909, %v884
        %v1160 = vpack.c.b16 %v910, %v885
        %v1161 = vpack.c.b16 %v911, %v886
        %v1162 = vpack.c.b16 %v912, %v887
        %v1163 = vpack.c.b16 %v913, %v888
        %v1164 = vpack.c.b16 %v914, %v889
        %v1165 = vpack.c.b16 %v915, %v890
        %v1166 = vpack.c.b16 %v916, %v891
        %v1167 = vpack.c.b16 %v917, %v892
        %v1168 = vpack.c.b16 %v918, %v893
        %v1169 = vpack.c.b16 %v944, %v919
        %v1170 = vpack.c.b16 %v945, %v920
        %v1171 = vpack.c.b16 %v946, %v921
        %v1172 = vpack.c.b16 %v947, %v922
        %v1173 = vpack.c.b16 %v948, %v923
        %v1174 = vpack.c.b16 %v949, %v924
        %v1175 = vpack.c.b16 %v950, %v925
        %v1176 = vpack.c.b16 %v951, %v926
        %v1177 = vpack.c.b16 %v952, %v927
        %v1178 = vpack.c.b16 %v953, %v928
        %v1179 = vpack.c.b16 %v954, %v929
        %v1180 = vpack.c.b16 %v955, %v930
        %v1181 = vpack.c.b16 %v956, %v931
        %v1182 = vpack.c.b16 %v957, %v932
        %v1183 = vpack.c.b16 %v958, %v933
        %v1184 = vpack.c.b16 %v959, %v934
        %v1185 = vpack.c.b16 %v960, %v935
        %v1186 = vpack.c.b16 %v961, %v936
        %v1187 = vpack.c.b16 %v962, %v937
        %v1188 = vpack.c.b16 %v963, %v938
        %v1189 = vpack.c.b16 %v964, %v939
        %v1190 = vpack.c.b16 %v965, %v940
        %v1191 = vpack.c.b16 %v966, %v941
        %v1192 = vpack.c.b16 %v967, %v942
        %v1193 = vpack.c.b16 %v968, %v943
        %v1194 = vpack.c.b16 %v994, %v969
        %v1195 = vpack.c.b16 %v995, %v970
        %v1196 = vpack.c.b16 %v996, %v971
        %v1197 = vpack.c.b16 %v997, %v972
        %v1198 = vpack.c.b16 %v998, %v973
        %v1199 = vpack.c.b16 %v999, %v974
        %v1200 = vpack.c.b16 %v1000, %v975
        %v1201 = vpack.c.b16 %v1001, %v976
        %v1202 = vpack.c.b16 %v1002, %v977
        %v1203 = vpack.c.b16 %v1003, %v978
        %v1204 = vpack.c.b16 %v1004, %v979
        %v1205 = vpack.c.b16 %v1005, %v980
        %v1206 = vpack.c.b16 %v1006, %v981
        %v1207 = vpack.c.b16 %v1007, %v982
        %v1208 = vpack.c.b16 %v1008, %v983
        %v1209 = vpack.c.b16 %v1009, %v984
        %v1210 = vpack.c.b16 %v1010, %v985
        %v1211 = vpack.c.b16 %v1011, %v986
        %v1212 = vpack.c.b16 %v1012, %v987
        %v1213 = vpack.c.b16 %v1013, %v988
        %v1214 = vpack.c.b16 %v1014, %v989
        %v1215 = vpack.c.b16 %v1015, %v990
        %v1216 = vpack.c.b16 %v1016, %v991
        %v1217 = vpack.c.b16 %v1017, %v992
        %v1218 = vpack.c.b16 %v1018, %v993
        %v1219 = vpack.c.b16 %v1044, %v1019
        %v1220 = vpack.c.b16 %v1045, %v1020
        %v1221 = vpack.c.b16 %v1046, %v1021
        %v1222 = vpack.c.b16 %v1047, %v1022
        %v1223 = vpack.c.b16 %v1048, %v1023
        %v1224 = vpack.c.b16 %v1049, %v1024
        %v1225 = vpack.c.b16 %v1050, %v1025
        %v1226 = vpack.c.b16 %v1051, %v1026
        %v1227 = vpack.c.b16 %v1052, %v1027
        %v1228 = vpack.c.b16 %v1053, %v1028
        %v1229 = vpack.c.b16 %v1054, %v1029
        %v1230 = vpack.c.b16 %v1055, %v1030
        %v1231 = vpack.c.b16 %v1056, %v1031
        %v1232 = vpack.c.b16 %v1057, %v1032
        %v1233 = vpack.c.b16 %v1058, %v1033
        %v1234 = vpack.c.b16 %v1059, %v1034
        %v1235 = vpack.c.b16 %v1060, %v1035
        %v1236 = vpack.c.b16 %v1061, %v1036
        %v1237 = vpack.c.b16 %v1062, %v1037
        %v1238 = vpack.c.b16 %v1063, %v1038
        %v1239 = vpack.c.b16 %v1064, %v1039
        %v1240 = vpack.c.b16 %v1065, %v1040
        %v1241 = vpack.c.b16 %v1066, %v1041
        %v1242 = vpack.c.b16 %v1067, %v1042
        %v1243 = vpack.c.b16 %v1068, %v1043
        %v1244 = vpack.c.b16 %v1069, %v1069
        %v1245 = vpack.c.b16 %v1070, %v1070
        %v1246 = vpack.c.b16 %v1071, %v1071
        %v1247 = vpack.c.b16 %v1072, %v1072
        %v1248 = vpack.c.b16 %v1073, %v1073
        %v1249 = vpack.c.b16 %v1074, %v1074
        %v1250 = vpack.c.b16 %v1075, %v1075
        %v1251 = vpack.c.b16 %v1076, %v1076
        %v1252 = vpack.c.b16 %v1077, %v1077
        %v1253 = vpack.c.b16 %v1078, %v1078
        %v1254 = vpack.c.b16 %v1079, %v1079
        %v1255 = vpack.c.b16 %v1080, %v1080
        %v1256 = vpack.c.b16 %v1081, %v1081
        %v1257 = vpack.c.b16 %v1082, %v1082
        %v1258 = vpack.c.b16 %v1083, %v1083
        %v1259 = vpack.c.b16 %v1084, %v1084
        %v1260 = vpack.c.b16 %v1085, %v1085
        %v1261 = vpack.c.b16 %v1086, %v1086
        %v1262 = vpack.c.b16 %v1087, %v1087
        %v1263 = vpack.c.b16 %v1088, %v1088
        %v1264 = vpack.c.b16 %v1089, %v1089
        %v1265 = vpack.c.b16 %v1090, %v1090
        %v1266 = vpack.c.b16 %v1091, %v1091
        %v1267 = vpack.c.b16 %v1092, %v1092
        %v1268 = vpack.c.b16 %v1093, %v1093
        %1444 = vmatprep.subr.bf16.mxu0 0
        %1445 = vmatpush1.bf16.xpose.msra.mxu0 0
        %1446 = vmatprep.subr.bf16.mxu0 %v1245
        %1447 = vmatpush1.bf16.xpose.msra.mxu0 %v1244
        %1448 = vmatprep.subr.bf16.mxu0 %v1220
        %1449 = vmatpush1.bf16.xpose.msra.mxu0 %v1219
        %1450 = vmatprep.subr.bf16.mxu0 %v1195
        %1451 = vmatpush1.bf16.xpose.msra.mxu0 %v1194
        %1452 = vmatprep.subr.bf16.mxu0 %v1170
        %1453 = vmatpush1.bf16.xpose.msra.mxu0 %v1169
        %1454 = vmatprep.subr.bf16.mxu0 %v1145
        %1455 = vmatpush1.bf16.xpose.msra.mxu0 %v1144
        %1456 = vmatprep.subr.bf16.mxu0 %v1120
        %1457 = vmatpush1.bf16.xpose.msra.mxu0 %v1119
        %1458 = vmatprep.subr.bf16.mxu0 %v1095
        %1459 = vmatpush1.bf16.xpose.msra.mxu0 %v1094
        %1460 = vmatprep.subr.bf16.mxu0 0
        %1461 = vmatpush2.bf16.xpose.msra.mxu0 0
        %1462 = vmatprep.subr.bf16.mxu0 0
        %1463 = vmatpush2.bf16.xpose.msra.mxu0 0
        %1464 = vmatprep.subr.bf16.mxu0 0
        %1465 = vmatpush2.bf16.xpose.msra.mxu0 0
        %1466 = vmatprep.subr.bf16.mxu0 0
        %1467 = vmatpush2.bf16.xpose.msra.mxu0 0
        %1468 = vmatprep.subr.bf16.mxu0 0
        %1469 = vmatpush2.bf16.xpose.msra.mxu0 0
        %1470 = vmatprep.subr.bf16.mxu0 0
        %1471 = vmatpush2.bf16.xpose.msra.mxu0 0
        %1472 = vmatprep.subr.bf16.mxu0 0
        %1473 = vmatpush2.bf16.xpose.msra.mxu0 0
        %1474 = vmatprep.subr.bf16.mxu0 0
        %1475 = vmatpush2.bf16.xpose.msra.mxu0 0
        %1476 = vmatprep.mubr.bf16.mxu0 %v451
        %1477 = vmatmul.mubr.bf16.gmra.mxu0 %v437
        %v1478 = vpop.f32.mrf.mxu0
        %v1479 = vadd.f32 0.0, %v1478
        %v1480 = vpop.f32.mrf.mxu0
        %v1481 = vpop.f32.mrf.mxu0
        %v1482 = vpop.f32.mrf.mxu0
        %1483 = vdwg.mxu0
        %1484 = vmatprep.subr.bf16.mxu0 0
        %1485 = vmatpush1.bf16.xpose.msra.mxu0 0
        %1486 = vmatprep.subr.bf16.mxu0 %v1247
        %1487 = vmatpush1.bf16.xpose.msra.mxu0 %v1246
        %1488 = vmatprep.subr.bf16.mxu0 %v1222
        %1489 = vmatpush1.bf16.xpose.msra.mxu0 %v1221
        %1490 = vmatprep.subr.bf16.mxu0 %v1197
        %1491 = vmatpush1.bf16.xpose.msra.mxu0 %v1196
        %1492 = vmatprep.subr.bf16.mxu0 %v1172
        %1493 = vmatpush1.bf16.xpose.msra.mxu0 %v1171
        %1494 = vmatprep.subr.bf16.mxu0 %v1147
        %1495 = vmatpush1.bf16.xpose.msra.mxu0 %v1146
        %1496 = vmatprep.subr.bf16.mxu0 %v1122
        %1497 = vmatpush1.bf16.xpose.msra.mxu0 %v1121
        %1498 = vmatprep.subr.bf16.mxu0 %v1097
        %1499 = vmatpush1.bf16.xpose.msra.mxu0 %v1096
        %1500 = vmatprep.subr.bf16.mxu0 0
        %1501 = vmatpush2.bf16.xpose.msra.mxu0 0
        %1502 = vmatprep.subr.bf16.mxu0 0
        %1503 = vmatpush2.bf16.xpose.msra.mxu0 0
        %1504 = vmatprep.subr.bf16.mxu0 0
        %1505 = vmatpush2.bf16.xpose.msra.mxu0 0
        %1506 = vmatprep.subr.bf16.mxu0 0
        %1507 = vmatpush2.bf16.xpose.msra.mxu0 0
        %1508 = vmatprep.subr.bf16.mxu0 0
        %1509 = vmatpush2.bf16.xpose.msra.mxu0 0
        %1510 = vmatprep.subr.bf16.mxu0 0
        %1511 = vmatpush2.bf16.xpose.msra.mxu0 0
        %1512 = vmatprep.subr.bf16.mxu0 0
        %1513 = vmatpush2.bf16.xpose.msra.mxu0 0
        %1514 = vmatprep.subr.bf16.mxu0 0
        %1515 = vmatpush2.bf16.xpose.msra.mxu0 0
        %1516 = vmatprep.mubr.bf16.mxu0 %v461
        %1517 = vmatmul.mubr.bf16.gmra.mxu0 %v459
        %v1518 = vpop.f32.mrf.mxu0
        %v1519 = vadd.f32 %v1479, %v1518
        %v1520 = vpop.f32.mrf.mxu0
        %v1521 = vpop.f32.mrf.mxu0
        %v1522 = vpop.f32.mrf.mxu0
        %1523 = vdwg.mxu0
        %1524 = vmatprep.subr.bf16.mxu0 0
        %1525 = vmatpush1.bf16.xpose.msra.mxu0 0
        %1526 = vmatprep.subr.bf16.mxu0 %v1249
        %1527 = vmatpush1.bf16.xpose.msra.mxu0 %v1248
        %1528 = vmatprep.subr.bf16.mxu0 %v1224
        %1529 = vmatpush1.bf16.xpose.msra.mxu0 %v1223
        %1530 = vmatprep.subr.bf16.mxu0 %v1199
        %1531 = vmatpush1.bf16.xpose.msra.mxu0 %v1198
        %1532 = vmatprep.subr.bf16.mxu0 %v1174
        %1533 = vmatpush1.bf16.xpose.msra.mxu0 %v1173
        %1534 = vmatprep.subr.bf16.mxu0 %v1149
        %1535 = vmatpush1.bf16.xpose.msra.mxu0 %v1148
        %1536 = vmatprep.subr.bf16.mxu0 %v1124
        %1537 = vmatpush1.bf16.xpose.msra.mxu0 %v1123
        %1538 = vmatprep.subr.bf16.mxu0 %v1099
        %1539 = vmatpush1.bf16.xpose.msra.mxu0 %v1098
        %1540 = vmatprep.subr.bf16.mxu0 0
        %1541 = vmatpush2.bf16.xpose.msra.mxu0 0
        %1542 = vmatprep.subr.bf16.mxu0 0
        %1543 = vmatpush2.bf16.xpose.msra.mxu0 0
        %1544 = vmatprep.subr.bf16.mxu0 0
        %1545 = vmatpush2.bf16.xpose.msra.mxu0 0
        %1546 = vmatprep.subr.bf16.mxu0 0
        %1547 = vmatpush2.bf16.xpose.msra.mxu0 0
        %1548 = vmatprep.subr.bf16.mxu0 0
        %1549 = vmatpush2.bf16.xpose.msra.mxu0 0
        %1550 = vmatprep.subr.bf16.mxu0 0
        %1551 = vmatpush2.bf16.xpose.msra.mxu0 0
        %1552 = vmatprep.subr.bf16.mxu0 0
        %1553 = vmatpush2.bf16.xpose.msra.mxu0 0
        %1554 = vmatprep.subr.bf16.mxu0 0
        %1555 = vmatpush2.bf16.xpose.msra.mxu0 0
        %1556 = vmatprep.mubr.bf16.mxu0 %v458
        %1557 = vmatmul.mubr.bf16.gmra.mxu0 %v444
        %v1558 = vpop.f32.mrf.mxu0
        %v1559 = vadd.f32 %v1519, %v1558
        %v1560 = vpop.f32.mrf.mxu0
        %v1561 = vpop.f32.mrf.mxu0
        %v1562 = vpop.f32.mrf.mxu0
        %1563 = vdwg.mxu0
        %1564 = vmatprep.subr.bf16.mxu0 0
        %1565 = vmatpush1.bf16.xpose.msra.mxu0 0
        %1566 = vmatprep.subr.bf16.mxu0 %v1251
        %1567 = vmatpush1.bf16.xpose.msra.mxu0 %v1250
        %1568 = vmatprep.subr.bf16.mxu0 %v1226
        %1569 = vmatpush1.bf16.xpose.msra.mxu0 %v1225
        %1570 = vmatprep.subr.bf16.mxu0 %v1201
        %1571 = vmatpush1.bf16.xpose.msra.mxu0 %v1200
        %1572 = vmatprep.subr.bf16.mxu0 %v1176
        %1573 = vmatpush1.bf16.xpose.msra.mxu0 %v1175
        %1574 = vmatprep.subr.bf16.mxu0 %v1151
        %1575 = vmatpush1.bf16.xpose.msra.mxu0 %v1150
        %1576 = vmatprep.subr.bf16.mxu0 %v1126
        %1577 = vmatpush1.bf16.xpose.msra.mxu0 %v1125
        %1578 = vmatprep.subr.bf16.mxu0 %v1101
        %1579 = vmatpush1.bf16.xpose.msra.mxu0 %v1100
        %1580 = vmatprep.subr.bf16.mxu0 0
        %1581 = vmatpush2.bf16.xpose.msra.mxu0 0
        %1582 = vmatprep.subr.bf16.mxu0 0
        %1583 = vmatpush2.bf16.xpose.msra.mxu0 0
        %1584 = vmatprep.subr.bf16.mxu0 0
        %1585 = vmatpush2.bf16.xpose.msra.mxu0 0
        %1586 = vmatprep.subr.bf16.mxu0 0
        %1587 = vmatpush2.bf16.xpose.msra.mxu0 0
        %1588 = vmatprep.subr.bf16.mxu0 0
        %1589 = vmatpush2.bf16.xpose.msra.mxu0 0
        %1590 = vmatprep.subr.bf16.mxu0 0
        %1591 = vmatpush2.bf16.xpose.msra.mxu0 0
        %1592 = vmatprep.subr.bf16.mxu0 0
        %1593 = vmatpush2.bf16.xpose.msra.mxu0 0
        %1594 = vmatprep.subr.bf16.mxu0 0
        %1595 = vmatpush2.bf16.xpose.msra.mxu0 0
        %1596 = vmatprep.mubr.bf16.mxu0 %v462
        %1597 = vmatmul.mubr.bf16.gmra.mxu0 %v460
        %v1598 = vpop.f32.mrf.mxu0
        %v1599 = vadd.f32 %v1559, %v1598
        %v1600 = vpop.f32.mrf.mxu0
        %v1601 = vpop.f32.mrf.mxu0
        %v1602 = vpop.f32.mrf.mxu0
        %1603 = vdwg.mxu0
        %1604 = vmatprep.subr.bf16.mxu0 0
        %1605 = vmatpush1.bf16.xpose.msra.mxu0 0
        %1606 = vmatprep.subr.bf16.mxu0 %v1253
        %1607 = vmatpush1.bf16.xpose.msra.mxu0 %v1252
        %1608 = vmatprep.subr.bf16.mxu0 %v1228
        %1609 = vmatpush1.bf16.xpose.msra.mxu0 %v1227
        %1610 = vmatprep.subr.bf16.mxu0 %v1203
        %1611 = vmatpush1.bf16.xpose.msra.mxu0 %v1202
        %1612 = vmatprep.subr.bf16.mxu0 %v1178
        %1613 = vmatpush1.bf16.xpose.msra.mxu0 %v1177
        %1614 = vmatprep.subr.bf16.mxu0 %v1153
        %1615 = vmatpush1.bf16.xpose.msra.mxu0 %v1152
        %1616 = vmatprep.subr.bf16.mxu0 %v1128
        %1617 = vmatpush1.bf16.xpose.msra.mxu0 %v1127
        %1618 = vmatprep.subr.bf16.mxu0 %v1103
        %1619 = vmatpush1.bf16.xpose.msra.mxu0 %v1102
        %1620 = vmatprep.subr.bf16.mxu0 0
        %1621 = vmatpush2.bf16.xpose.msra.mxu0 0
        %1622 = vmatprep.subr.bf16.mxu0 0
        %1623 = vmatpush2.bf16.xpose.msra.mxu0 0
        %1624 = vmatprep.subr.bf16.mxu0 0
        %1625 = vmatpush2.bf16.xpose.msra.mxu0 0
        %1626 = vmatprep.subr.bf16.mxu0 0
        %1627 = vmatpush2.bf16.xpose.msra.mxu0 0
        %1628 = vmatprep.subr.bf16.mxu0 0
        %1629 = vmatpush2.bf16.xpose.msra.mxu0 0
        %1630 = vmatprep.subr.bf16.mxu0 0
        %1631 = vmatpush2.bf16.xpose.msra.mxu0 0
        %1632 = vmatprep.subr.bf16.mxu0 0
        %1633 = vmatpush2.bf16.xpose.msra.mxu0 0
        %1634 = vmatprep.subr.bf16.mxu0 0
        %1635 = vmatpush2.bf16.xpose.msra.mxu0 0
        %1636 = vmatprep.mubr.bf16.mxu0 %v500
        %1637 = vmatmul.mubr.bf16.gmra.mxu0 %v486
        %v1638 = vpop.f32.mrf.mxu0
        %v1639 = vadd.f32 %v1599, %v1638
        %v1640 = vpop.f32.mrf.mxu0
        %v1641 = vpop.f32.mrf.mxu0
        %v1642 = vpop.f32.mrf.mxu0
        %1643 = vdwg.mxu0
        %1644 = vmatprep.subr.bf16.mxu0 0
        %1645 = vmatpush1.bf16.xpose.msra.mxu0 0
        %1646 = vmatprep.subr.bf16.mxu0 %v1255
        %1647 = vmatpush1.bf16.xpose.msra.mxu0 %v1254
        %1648 = vmatprep.subr.bf16.mxu0 %v1230
        %1649 = vmatpush1.bf16.xpose.msra.mxu0 %v1229
        %1650 = vmatprep.subr.bf16.mxu0 %v1205
        %1651 = vmatpush1.bf16.xpose.msra.mxu0 %v1204
        %1652 = vmatprep.subr.bf16.mxu0 %v1180
        %1653 = vmatpush1.bf16.xpose.msra.mxu0 %v1179
        %1654 = vmatprep.subr.bf16.mxu0 %v1155
        %1655 = vmatpush1.bf16.xpose.msra.mxu0 %v1154
        %1656 = vmatprep.subr.bf16.mxu0 %v1130
        %1657 = vmatpush1.bf16.xpose.msra.mxu0 %v1129
        %1658 = vmatprep.subr.bf16.mxu0 %v1105
        %1659 = vmatpush1.bf16.xpose.msra.mxu0 %v1104
        %1660 = vmatprep.subr.bf16.mxu0 0
        %1661 = vmatpush2.bf16.xpose.msra.mxu0 0
        %1662 = vmatprep.subr.bf16.mxu0 0
        %1663 = vmatpush2.bf16.xpose.msra.mxu0 0
        %1664 = vmatprep.subr.bf16.mxu0 0
        %1665 = vmatpush2.bf16.xpose.msra.mxu0 0
        %1666 = vmatprep.subr.bf16.mxu0 0
        %1667 = vmatpush2.bf16.xpose.msra.mxu0 0
        %1668 = vmatprep.subr.bf16.mxu0 0
        %1669 = vmatpush2.bf16.xpose.msra.mxu0 0
        %1670 = vmatprep.subr.bf16.mxu0 0
        %1671 = vmatpush2.bf16.xpose.msra.mxu0 0
        %1672 = vmatprep.subr.bf16.mxu0 0
        %1673 = vmatpush2.bf16.xpose.msra.mxu0 0
        %1674 = vmatprep.subr.bf16.mxu0 0
        %1675 = vmatpush2.bf16.xpose.msra.mxu0 0
        %1676 = vmatprep.mubr.bf16.mxu0 %v510
        %1677 = vmatmul.mubr.bf16.gmra.mxu0 %v508
        %v1678 = vpop.f32.mrf.mxu0
        %v1679 = vadd.f32 %v1639, %v1678
        %v1680 = vpop.f32.mrf.mxu0
        %v1681 = vpop.f32.mrf.mxu0
        %v1682 = vpop.f32.mrf.mxu0
        %1683 = vdwg.mxu0
        %1684 = vmatprep.subr.bf16.mxu0 0
        %1685 = vmatpush1.bf16.xpose.msra.mxu0 0
        %1686 = vmatprep.subr.bf16.mxu0 %v1257
        %1687 = vmatpush1.bf16.xpose.msra.mxu0 %v1256
        %1688 = vmatprep.subr.bf16.mxu0 %v1232
        %1689 = vmatpush1.bf16.xpose.msra.mxu0 %v1231
        %1690 = vmatprep.subr.bf16.mxu0 %v1207
        %1691 = vmatpush1.bf16.xpose.msra.mxu0 %v1206
        %1692 = vmatprep.subr.bf16.mxu0 %v1182
        %1693 = vmatpush1.bf16.xpose.msra.mxu0 %v1181
        %1694 = vmatprep.subr.bf16.mxu0 %v1157
        %1695 = vmatpush1.bf16.xpose.msra.mxu0 %v1156
        %1696 = vmatprep.subr.bf16.mxu0 %v1132
        %1697 = vmatpush1.bf16.xpose.msra.mxu0 %v1131
        %1698 = vmatprep.subr.bf16.mxu0 %v1107
        %1699 = vmatpush1.bf16.xpose.msra.mxu0 %v1106
        %1700 = vmatprep.subr.bf16.mxu0 0
        %1701 = vmatpush2.bf16.xpose.msra.mxu0 0
        %1702 = vmatprep.subr.bf16.mxu0 0
        %1703 = vmatpush2.bf16.xpose.msra.mxu0 0
        %1704 = vmatprep.subr.bf16.mxu0 0
        %1705 = vmatpush2.bf16.xpose.msra.mxu0 0
        %1706 = vmatprep.subr.bf16.mxu0 0
        %1707 = vmatpush2.bf16.xpose.msra.mxu0 0
        %1708 = vmatprep.subr.bf16.mxu0 0
        %1709 = vmatpush2.bf16.xpose.msra.mxu0 0
        %1710 = vmatprep.subr.bf16.mxu0 0
        %1711 = vmatpush2.bf16.xpose.msra.mxu0 0
        %1712 = vmatprep.subr.bf16.mxu0 0
        %1713 = vmatpush2.bf16.xpose.msra.mxu0 0
        %1714 = vmatprep.subr.bf16.mxu0 0
        %1715 = vmatpush2.bf16.xpose.msra.mxu0 0
        %1716 = vmatprep.mubr.bf16.mxu0 %v507
        %1717 = vmatmul.mubr.bf16.gmra.mxu0 %v493
        %v1718 = vpop.f32.mrf.mxu0
        %v1719 = vadd.f32 %v1679, %v1718
        %v1720 = vpop.f32.mrf.mxu0
        %v1721 = vpop.f32.mrf.mxu0
        %v1722 = vpop.f32.mrf.mxu0
        %1723 = vdwg.mxu0
        %1724 = vmatprep.subr.bf16.mxu0 0
        %1725 = vmatpush1.bf16.xpose.msra.mxu0 0
        %1726 = vmatprep.subr.bf16.mxu0 %v1259
        %1727 = vmatpush1.bf16.xpose.msra.mxu0 %v1258
        %1728 = vmatprep.subr.bf16.mxu0 %v1234
        %1729 = vmatpush1.bf16.xpose.msra.mxu0 %v1233
        %1730 = vmatprep.subr.bf16.mxu0 %v1209
        %1731 = vmatpush1.bf16.xpose.msra.mxu0 %v1208
        %1732 = vmatprep.subr.bf16.mxu0 %v1184
        %1733 = vmatpush1.bf16.xpose.msra.mxu0 %v1183
        %1734 = vmatprep.subr.bf16.mxu0 %v1159
        %1735 = vmatpush1.bf16.xpose.msra.mxu0 %v1158
        %1736 = vmatprep.subr.bf16.mxu0 %v1134
        %1737 = vmatpush1.bf16.xpose.msra.mxu0 %v1133
        %1738 = vmatprep.subr.bf16.mxu0 %v1109
        %1739 = vmatpush1.bf16.xpose.msra.mxu0 %v1108
        %1740 = vmatprep.subr.bf16.mxu0 0
        %1741 = vmatpush2.bf16.xpose.msra.mxu0 0
        %1742 = vmatprep.subr.bf16.mxu0 0
        %1743 = vmatpush2.bf16.xpose.msra.mxu0 0
        %1744 = vmatprep.subr.bf16.mxu0 0
        %1745 = vmatpush2.bf16.xpose.msra.mxu0 0
        %1746 = vmatprep.subr.bf16.mxu0 0
        %1747 = vmatpush2.bf16.xpose.msra.mxu0 0
        %1748 = vmatprep.subr.bf16.mxu0 0
        %1749 = vmatpush2.bf16.xpose.msra.mxu0 0
        %1750 = vmatprep.subr.bf16.mxu0 0
        %1751 = vmatpush2.bf16.xpose.msra.mxu0 0
        %1752 = vmatprep.subr.bf16.mxu0 0
        %1753 = vmatpush2.bf16.xpose.msra.mxu0 0
        %1754 = vmatprep.subr.bf16.mxu0 0
        %1755 = vmatpush2.bf16.xpose.msra.mxu0 0
        %1756 = vmatprep.mubr.bf16.mxu0 %v511
        %1757 = vmatmul.mubr.bf16.gmra.mxu0 %v509
        %v1758 = vpop.f32.mrf.mxu0
        %v1759 = vadd.f32 %v1719, %v1758
        %v1760 = vpop.f32.mrf.mxu0
        %v1761 = vpop.f32.mrf.mxu0
        %v1762 = vpop.f32.mrf.mxu0
        %1763 = vdwg.mxu0
        %1764 = vmatprep.subr.bf16.mxu0 0
        %1765 = vmatpush1.bf16.xpose.msra.mxu0 0
        %1766 = vmatprep.subr.bf16.mxu0 %v1261
        %1767 = vmatpush1.bf16.xpose.msra.mxu0 %v1260
        %1768 = vmatprep.subr.bf16.mxu0 %v1236
        %1769 = vmatpush1.bf16.xpose.msra.mxu0 %v1235
        %1770 = vmatprep.subr.bf16.mxu0 %v1211
        %1771 = vmatpush1.bf16.xpose.msra.mxu0 %v1210
        %1772 = vmatprep.subr.bf16.mxu0 %v1186
        %1773 = vmatpush1.bf16.xpose.msra.mxu0 %v1185
        %1774 = vmatprep.subr.bf16.mxu0 %v1161
        %1775 = vmatpush1.bf16.xpose.msra.mxu0 %v1160
        %1776 = vmatprep.subr.bf16.mxu0 %v1136
        %1777 = vmatpush1.bf16.xpose.msra.mxu0 %v1135
        %1778 = vmatprep.subr.bf16.mxu0 %v1111
        %1779 = vmatpush1.bf16.xpose.msra.mxu0 %v1110
        %1780 = vmatprep.subr.bf16.mxu0 0
        %1781 = vmatpush2.bf16.xpose.msra.mxu0 0
        %1782 = vmatprep.subr.bf16.mxu0 0
        %1783 = vmatpush2.bf16.xpose.msra.mxu0 0
        %1784 = vmatprep.subr.bf16.mxu0 0
        %1785 = vmatpush2.bf16.xpose.msra.mxu0 0
        %1786 = vmatprep.subr.bf16.mxu0 0
        %1787 = vmatpush2.bf16.xpose.msra.mxu0 0
        %1788 = vmatprep.subr.bf16.mxu0 0
        %1789 = vmatpush2.bf16.xpose.msra.mxu0 0
        %1790 = vmatprep.subr.bf16.mxu0 0
        %1791 = vmatpush2.bf16.xpose.msra.mxu0 0
        %1792 = vmatprep.subr.bf16.mxu0 0
        %1793 = vmatpush2.bf16.xpose.msra.mxu0 0
        %1794 = vmatprep.subr.bf16.mxu0 0
        %1795 = vmatpush2.bf16.xpose.msra.mxu0 0
        %1796 = vmatprep.mubr.bf16.mxu0 %v549
        %1797 = vmatmul.mubr.bf16.gmra.mxu0 %v535
        %v1798 = vpop.f32.mrf.mxu0
        %v1799 = vadd.f32 %v1759, %v1798
        %v1800 = vpop.f32.mrf.mxu0
        %v1801 = vpop.f32.mrf.mxu0
        %v1802 = vpop.f32.mrf.mxu0
        %1803 = vdwg.mxu0
        %1804 = vmatprep.subr.bf16.mxu0 0
        %1805 = vmatpush1.bf16.xpose.msra.mxu0 0
        %1806 = vmatprep.subr.bf16.mxu0 %v1263
        %1807 = vmatpush1.bf16.xpose.msra.mxu0 %v1262
        %1808 = vmatprep.subr.bf16.mxu0 %v1238
        %1809 = vmatpush1.bf16.xpose.msra.mxu0 %v1237
        %1810 = vmatprep.subr.bf16.mxu0 %v1213
        %1811 = vmatpush1.bf16.xpose.msra.mxu0 %v1212
        %1812 = vmatprep.subr.bf16.mxu0 %v1188
        %1813 = vmatpush1.bf16.xpose.msra.mxu0 %v1187
        %1814 = vmatprep.subr.bf16.mxu0 %v1163
        %1815 = vmatpush1.bf16.xpose.msra.mxu0 %v1162
        %1816 = vmatprep.subr.bf16.mxu0 %v1138
        %1817 = vmatpush1.bf16.xpose.msra.mxu0 %v1137
        %1818 = vmatprep.subr.bf16.mxu0 %v1113
        %1819 = vmatpush1.bf16.xpose.msra.mxu0 %v1112
        %1820 = vmatprep.subr.bf16.mxu0 0
        %1821 = vmatpush2.bf16.xpose.msra.mxu0 0
        %1822 = vmatprep.subr.bf16.mxu0 0
        %1823 = vmatpush2.bf16.xpose.msra.mxu0 0
        %1824 = vmatprep.subr.bf16.mxu0 0
        %1825 = vmatpush2.bf16.xpose.msra.mxu0 0
        %1826 = vmatprep.subr.bf16.mxu0 0
        %1827 = vmatpush2.bf16.xpose.msra.mxu0 0
        %1828 = vmatprep.subr.bf16.mxu0 0
        %1829 = vmatpush2.bf16.xpose.msra.mxu0 0
        %1830 = vmatprep.subr.bf16.mxu0 0
        %1831 = vmatpush2.bf16.xpose.msra.mxu0 0
        %1832 = vmatprep.subr.bf16.mxu0 0
        %1833 = vmatpush2.bf16.xpose.msra.mxu0 0
        %1834 = vmatprep.subr.bf16.mxu0 0
        %1835 = vmatpush2.bf16.xpose.msra.mxu0 0
        %1836 = vmatprep.mubr.bf16.mxu0 %v559
        %1837 = vmatmul.mubr.bf16.gmra.mxu0 %v557
        %v1838 = vpop.f32.mrf.mxu0
        %v1839 = vadd.f32 %v1799, %v1838
        %v1840 = vpop.f32.mrf.mxu0
        %v1841 = vpop.f32.mrf.mxu0
        %v1842 = vpop.f32.mrf.mxu0
        %1843 = vdwg.mxu0
        %1844 = vmatprep.subr.bf16.mxu0 0
        %1845 = vmatpush1.bf16.xpose.msra.mxu0 0
        %1846 = vmatprep.subr.bf16.mxu0 %v1265
        %1847 = vmatpush1.bf16.xpose.msra.mxu0 %v1264
        %1848 = vmatprep.subr.bf16.mxu0 %v1240
        %1849 = vmatpush1.bf16.xpose.msra.mxu0 %v1239
        %1850 = vmatprep.subr.bf16.mxu0 %v1215
        %1851 = vmatpush1.bf16.xpose.msra.mxu0 %v1214
        %1852 = vmatprep.subr.bf16.mxu0 %v1190
        %1853 = vmatpush1.bf16.xpose.msra.mxu0 %v1189
        %1854 = vmatprep.subr.bf16.mxu0 %v1165
        %1855 = vmatpush1.bf16.xpose.msra.mxu0 %v1164
        %1856 = vmatprep.subr.bf16.mxu0 %v1140
        %1857 = vmatpush1.bf16.xpose.msra.mxu0 %v1139
        %1858 = vmatprep.subr.bf16.mxu0 %v1115
        %1859 = vmatpush1.bf16.xpose.msra.mxu0 %v1114
        %1860 = vmatprep.subr.bf16.mxu0 0
        %1861 = vmatpush2.bf16.xpose.msra.mxu0 0
        %1862 = vmatprep.subr.bf16.mxu0 0
        %1863 = vmatpush2.bf16.xpose.msra.mxu0 0
        %1864 = vmatprep.subr.bf16.mxu0 0
        %1865 = vmatpush2.bf16.xpose.msra.mxu0 0
        %1866 = vmatprep.subr.bf16.mxu0 0
        %1867 = vmatpush2.bf16.xpose.msra.mxu0 0
        %1868 = vmatprep.subr.bf16.mxu0 0
        %1869 = vmatpush2.bf16.xpose.msra.mxu0 0
        %1870 = vmatprep.subr.bf16.mxu0 0
        %1871 = vmatpush2.bf16.xpose.msra.mxu0 0
        %1872 = vmatprep.subr.bf16.mxu0 0
        %1873 = vmatpush2.bf16.xpose.msra.mxu0 0
        %1874 = vmatprep.subr.bf16.mxu0 0
        %1875 = vmatpush2.bf16.xpose.msra.mxu0 0
        %1876 = vmatprep.mubr.bf16.mxu0 %v556
        %1877 = vmatmul.mubr.bf16.gmra.mxu0 %v542
        %v1878 = vpop.f32.mrf.mxu0
        %v1879 = vadd.f32 %v1839, %v1878
        %v1880 = vpop.f32.mrf.mxu0
        %v1881 = vpop.f32.mrf.mxu0
        %v1882 = vpop.f32.mrf.mxu0
        %1883 = vdwg.mxu0
        %1884 = vmatprep.subr.bf16.mxu0 0
        %1885 = vmatpush1.bf16.xpose.msra.mxu0 0
        %1886 = vmatprep.subr.bf16.mxu0 %v1267
        %1887 = vmatpush1.bf16.xpose.msra.mxu0 %v1266
        %1888 = vmatprep.subr.bf16.mxu0 %v1242
        %1889 = vmatpush1.bf16.xpose.msra.mxu0 %v1241
        %1890 = vmatprep.subr.bf16.mxu0 %v1217
        %1891 = vmatpush1.bf16.xpose.msra.mxu0 %v1216
        %1892 = vmatprep.subr.bf16.mxu0 %v1192
        %1893 = vmatpush1.bf16.xpose.msra.mxu0 %v1191
        %1894 = vmatprep.subr.bf16.mxu0 %v1167
        %1895 = vmatpush1.bf16.xpose.msra.mxu0 %v1166
        %1896 = vmatprep.subr.bf16.mxu0 %v1142
        %1897 = vmatpush1.bf16.xpose.msra.mxu0 %v1141
        %1898 = vmatprep.subr.bf16.mxu0 %v1117
        %1899 = vmatpush1.bf16.xpose.msra.mxu0 %v1116
        %1900 = vmatprep.subr.bf16.mxu0 0
        %1901 = vmatpush2.bf16.xpose.msra.mxu0 0
        %1902 = vmatprep.subr.bf16.mxu0 0
        %1903 = vmatpush2.bf16.xpose.msra.mxu0 0
        %1904 = vmatprep.subr.bf16.mxu0 0
        %1905 = vmatpush2.bf16.xpose.msra.mxu0 0
        %1906 = vmatprep.subr.bf16.mxu0 0
        %1907 = vmatpush2.bf16.xpose.msra.mxu0 0
        %1908 = vmatprep.subr.bf16.mxu0 0
        %1909 = vmatpush2.bf16.xpose.msra.mxu0 0
        %1910 = vmatprep.subr.bf16.mxu0 0
        %1911 = vmatpush2.bf16.xpose.msra.mxu0 0
        %1912 = vmatprep.subr.bf16.mxu0 0
        %1913 = vmatpush2.bf16.xpose.msra.mxu0 0
        %1914 = vmatprep.subr.bf16.mxu0 0
        %1915 = vmatpush2.bf16.xpose.msra.mxu0 0
        %1916 = vmatprep.mubr.bf16.mxu0 %v560
        %1917 = vmatmul.mubr.bf16.gmra.mxu0 %v558
        %v1918 = vpop.f32.mrf.mxu0
        %v1919 = vadd.f32 %v1879, %v1918
        %v1920 = vpop.f32.mrf.mxu0
        %v1921 = vpop.f32.mrf.mxu0
        %v1922 = vpop.f32.mrf.mxu0
        %1923 = vdwg.mxu0
        %1924 = vmatprep.subr.bf16.mxu0 0
        %1925 = vmatpush1.bf16.xpose.msra.mxu0 0
        %1926 = vmatprep.subr.bf16.mxu0 0
        %1927 = vmatpush1.bf16.xpose.msra.mxu0 %v1268
        %1928 = vmatprep.subr.bf16.mxu0 0
        %1929 = vmatpush1.bf16.xpose.msra.mxu0 %v1243
        %1930 = vmatprep.subr.bf16.mxu0 0
        %1931 = vmatpush1.bf16.xpose.msra.mxu0 %v1218
        %1932 = vmatprep.subr.bf16.mxu0 0
        %1933 = vmatpush1.bf16.xpose.msra.mxu0 %v1193
        %1934 = vmatprep.subr.bf16.mxu0 0
        %1935 = vmatpush1.bf16.xpose.msra.mxu0 %v1168
        %1936 = vmatprep.subr.bf16.mxu0 0
        %1937 = vmatpush1.bf16.xpose.msra.mxu0 %v1143
        %1938 = vmatprep.subr.bf16.mxu0 0
        %1939 = vmatpush1.bf16.xpose.msra.mxu0 %v1118
        %1940 = vmatprep.subr.bf16.mxu0 0
        %1941 = vmatpush2.bf16.xpose.msra.mxu0 0
        %1942 = vmatprep.subr.bf16.mxu0 0
        %1943 = vmatpush2.bf16.xpose.msra.mxu0 0
        %1944 = vmatprep.subr.bf16.mxu0 0
        %1945 = vmatpush2.bf16.xpose.msra.mxu0 0
        %1946 = vmatprep.subr.bf16.mxu0 0
        %1947 = vmatpush2.bf16.xpose.msra.mxu0 0
        %1948 = vmatprep.subr.bf16.mxu0 0
        %1949 = vmatpush2.bf16.xpose.msra.mxu0 0
        %1950 = vmatprep.subr.bf16.mxu0 0
        %1951 = vmatpush2.bf16.xpose.msra.mxu0 0
        %1952 = vmatprep.subr.bf16.mxu0 0
        %1953 = vmatpush2.bf16.xpose.msra.mxu0 0
        %1954 = vmatprep.subr.bf16.mxu0 0
        %1955 = vmatpush2.bf16.xpose.msra.mxu0 0
        %1956 = vmatprep.mubr.bf16.mxu0 0
        %1957 = vmatmul.mubr.bf16.gmra.mxu0 %v574
        %v1958 = vpop.f32.mrf.mxu0
        %v1959 = vadd.f32 %v1919, %v1958
        %v1960 = vpop.f32.mrf.mxu0
        %v1961 = vpop.f32.mrf.mxu0
        %v1962 = vpop.f32.mrf.mxu0
        %1963 = vdwg.mxu0
        %v1964 = vadd.f32 %v236, %v1959
        %vm1965 = vcmask 812032
        %1966 = vst.msk [vmem:[#allocation8] sm:$0x3] %vm1965, %v1964
        %p1967 = scmp.eq.s32.totalorder %s21, 3
        // Predicated region
        $region49: #{tpu_custom_call.1} parent=31 // pred_check
          %p1968 = pneg %p1967
        $region50: #{tpu_custom_call.1} parent=31 // pred_check_branch
          %1970 = sbr.rel (%p1968) target = $region52
        $region51: #{tpu_custom_call.1} parent=31 // pred_region
          %v1971 = vld [vmem:[#allocation8] sm:$0x3]
          %v1972 = vld [vmem:[#allocation7] sm:$0x1]
          %v1974 = vlaneseq
          %v1975 = vshrl.u32 %v1974, 7
          %v1976 = vsub.s32 0, %v1975
          %v1977 = vrot.slane %v1972, %v1976
          %v1979 = vadd.f32 %v1971, %v1977
          %v1980 = vmax.f32 %v1979, 0.0
          %1981 = vst.msk [vmem:[#allocation8] sm:$0x3] %vm1965, %v1980
        $region52: #{tpu_custom_call.1} parent=31 // pred_fallthru
          _
        // Predicated region
        $region53: #{tpu_custom_call.1} parent=31 // pred_check
          %p1982 = pneg %p107
        $region54: #{tpu_custom_call.1} parent=31 // pred_check_branch
          %1984 = sbr.rel (%p1982) target = $region56
        $region55: #{tpu_custom_call.1} parent=31 // pred_region
          %s1986 = ssub.s32 32, 32
          %1987 = vsyncadd [#allocation4], %s1986
          %s1989 = sshll.u32 [#allocation8], 4
          %s1990 = int_to_ptr.vmem [resolvable:$true] %s1989
          %1992 = dma.vmem_to_hbm [thread:$0]  %s1990, 32, %s3, [#allocation4]
        $region56: #{tpu_custom_call.1} parent=31 // pred_fallthru
          _
        // Predicated region
        $region57: #{tpu_custom_call.1} parent=31 // pred_check
          %p1993 = pneg %p107
        $region58: #{tpu_custom_call.1} parent=31 // pred_check_branch
          %1995 = sbr.rel (%p1993) target = $region60
        $region59: #{tpu_custom_call.1} parent=31 // pred_region
          %1996 = dma.done [#allocation4], 32
        $region60: #{tpu_custom_call.1} parent=31 // pred_fallthru
          _
      $region32: #{tpu_custom_call.1} parent=5 // pred_fallthru
        _
      %p1997 = scmp.le.s32.totalorder 2, %s16
      // Predicated region
      $region61: #{tpu_custom_call.1} parent=5 // pred_check
        %p1998 = pneg %p1997
      $region62: #{tpu_custom_call.1} parent=5 // pred_check_branch
        %2000 = sbr.rel (%p1998) target = $region64
      $region63: #{tpu_custom_call.1} parent=5 // pred_region
        %s2001 = ssub.s32 %s16, 2
      $region64: #{tpu_custom_call.1} parent=5 // pred_fallthru
        _
    $region6: #{tpu_custom_call.1} parent=1 // loop_footer
      %s20 = sadd.s32 1, %s16
    $region7: #{tpu_custom_call.1} parent=1 // loop_footer_branch
      %15 = sbr.rel target = $region3
    $region8: #{tpu_custom_call.1} parent=1 // loop_exit
      _
    %2002 = vsyncpa [#allocation3], 1
    %s2003 = scalar_lea.sflag [#allocation3], 1
    %2004 = vsyncpa %s2003, 1
    %2005 = vsyncpa [#allocation6], 1
    %s2006 = scalar_lea.sflag [#allocation6], 1
    %2007 = vsyncpa %s2006, 1
    %2008 = vsyncpa [#allocation4], 1
    %s2009 = scalar_lea.sflag [#allocation4], 1
    %2010 = vsyncpa %s2009, 1

</llo_original>
